<compile_context>
chip_gen: v6e
topology: v6e:2x2x1
jax: 0.10.0
libtpu: 0.0.40
codegen_flags: <defaults>
</compile_context>

<pallas_src>
import jax
import jax.numpy as jnp
from jax.experimental import pallas as pl
from jax.experimental.pallas import tpu as pltpu


NUM_EMBEDDINGS = 50  # nn.Embedding(50, num_pos_feats)


def _pick_channel_tile(d):
    """Largest multiple-of-8 channel tile (<=128) dividing num_pos_feats."""
    for tc in (128, 64, 32, 16, 8):
        if d % tc == 0:
            return tc
    # TODO(synk): pad num_pos_feats up to a multiple of 8 for odd widths.
    raise ValueError(f"num_pos_feats={d} must be a multiple of 8")


def _pos_embed_kernel(col_t_ref, row_t_ref, e_col_ref, e_row_ref, out_ref):
    # col_t_ref: (TC, W)    col_t[c, w] = col_embed.weight[w, c-block_offset]
    # row_t_ref: (TC, H)    row_t[c, h] = row_embed.weight[h, c-block_offset]
    # e_col_ref: (W, H*W)   one-hot expander  E_col[w, h*W + w] = 1
    # e_row_ref: (H, H*W)   one-hot expander  E_row[h, h*W + w] = 1
    # out_ref:   (TC, H*W)  lane-dense channel block of the NCHW slab
    half = pl.program_id(0)

    @pl.when(half == 0)
    def _():
        # channels [0, D): out[c, h*W + w] = col_t[c, w]
        out_ref[...] = jnp.dot(
            col_t_ref[...], e_col_ref[...],
            precision=jax.lax.Precision.HIGHEST,
            preferred_element_type=jnp.float32,
        ).astype(out_ref.dtype)

    @pl.when(half == 1)
    def _():
        # channels [D, 2D): out[D + c, h*W + w] = row_t[c, h]
        out_ref[...] = jnp.dot(
            row_t_ref[...], e_row_ref[...],
            precision=jax.lax.Precision.HIGHEST,
            preferred_element_type=jnp.float32,
        ).astype(out_ref.dtype)


def position_embedding_learned(x, row_weight, col_weight, out_dtype=jnp.float32):
    """Forward pass of PositionEmbeddingLearned.

    x:          (B, C, H, W)  NCHW — only the shape is consumed.
    row_weight: (50, D) learned row embedding table.
    col_weight: (50, D) learned column embedding table.
    Returns:    (B, 2D, H, W) in `out_dtype` (float32 by default; pass bf16 if
                the consumer runs bf16 — halves the HBM writeback).
    """
    B = x.shape[0]
    H, W = x.shape[-2], x.shape[-1]
    D = row_weight.shape[1]
    HW = H * W

    # Static-index embedding "gather" (indices are arange(W)/arange(H)) plus a
    # tiny transpose so the channel dim lands on the sublane axis in-kernel.
    col_t = col_weight[:W].T.astype(jnp.float32)   # (D, W)
    row_t = row_weight[:H].T.astype(jnp.float32)   # (D, H)

    # Exact 0/1 expander matrices (built once per call; <=500 KB at DETR scale).
    k = jnp.arange(HW, dtype=jnp.int32)
    e_col = (k[None, :] % W == jnp.arange(W, dtype=jnp.int32)[:, None]
             ).astype(jnp.float32)                 # (W, HW)
    e_row = (k[None, :] // W == jnp.arange(H, dtype=jnp.int32)[:, None]
             ).astype(jnp.float32)                 # (H, HW)

    tc = _pick_channel_tile(D)
    nj = D // tc

    slab = pl.pallas_call(
        _pos_embed_kernel,
        out_shape=jax.ShapeDtypeStruct((2 * D, HW), out_dtype),
        grid_spec=pltpu.PrefetchScalarGridSpec(
            num_scalar_prefetch=0,
            grid=(2, nj),                          # (col/row half, channel block)
            in_specs=[
                pl.BlockSpec((tc, W), lambda half, j: (j, 0)),
                pl.BlockSpec((tc, H), lambda half, j: (j, 0)),
                pl.BlockSpec((W, HW), lambda half, j: (0, 0)),  # fetched once
                pl.BlockSpec((H, HW), lambda half, j: (0, 0)),  # fetched once
            ],
            out_specs=pl.BlockSpec((tc, HW),
                                   lambda half, j: (half * nj + j, 0)),
        ),
        compiler_params=pltpu.CompilerParams(
            dimension_semantics=("parallel", "parallel"),
        ),
    )(col_t, row_t, e_col, e_row)                  # (2D, H*W), lane-dense

    # Free row-major reshape to NCHW-per-batch, then a zero-compute broadcast
    # over B.  Keep this inside the consumer's jit so the broadcast stays a
    # view rather than materializing B copies in HBM.
    pos = slab.reshape(2 * D, H, W)
    return jnp.broadcast_to(pos[None], (B, 2 * D, H, W))


def _reference(x, row_weight, col_weight):
    """Plain-JAX reference mirroring the PyTorch forward exactly."""
    B = x.shape[0]
    H, W = x.shape[-2], x.shape[-1]
    x_emb = col_weight[jnp.arange(W)]                      # (W, D)
    y_emb = row_weight[jnp.arange(H)]                      # (H, D)
    pos = jnp.concatenate(
        [
            jnp.broadcast_to(x_emb[None, :, :], (H, W, x_emb.shape[-1])),
            jnp.broadcast_to(y_emb[:, None, :], (H, W, y_emb.shape[-1])),
        ],
        axis=-1,
    )                                                      # (H, W, 2D)
    pos = jnp.transpose(pos, (2, 0, 1))[None]              # (1, 2D, H, W)
    return jnp.broadcast_to(pos, (B,) + pos.shape[1:])


if __name__ == "__main__":
    # Small, forward-consistent shapes: batch=2, channels=4, spatial=16x16,
    # num_pos_feats=32 -> output channels 64.
    B, C, H, W = 2, 4, 16, 16
    num_pos_feats = 32

    key = jax.random.PRNGKey(0)
    k_x, k_row, k_col = jax.random.split(key, 3)

    x = jax.random.normal(k_x, (B, C, H, W), dtype=jnp.float32)
    # nn.init.uniform_ -> U[0, 1)
    row_weight = jax.random.uniform(k_row, (NUM_EMBEDDINGS, num_pos_feats),
                                    dtype=jnp.float32)
    col_weight = jax.random.uniform(k_col, (NUM_EMBEDDINGS, num_pos_feats),
                                    dtype=jnp.float32)

    pos = jax.jit(position_embedding_learned)(x, row_weight, col_weight)
    pos = jax.block_until_ready(pos)

    ref = _reference(x, row_weight, col_weight)
    assert pos.shape == (B, 2 * num_pos_feats, H, W), pos.shape
    # One-hot MXU expansion at precision=HIGHEST is exact for f32 inputs.
    assert jnp.allclose(pos, ref, rtol=0.0, atol=1e-6), float(
        jnp.max(jnp.abs(pos - ref)))

    print("KERNEL_OK")
</pallas_src>

<mosaic_0001>
module attributes {stable_mosaic.version = 11 : i64} {
  func.func @_pos_embed_kernel(%arg0: i32, %arg1: i32, %arg2: memref<32x16xf32, #tpu.memory_space<vmem>>, %arg3: memref<32x16xf32, #tpu.memory_space<vmem>>, %arg4: memref<16x256xf32, #tpu.memory_space<vmem>>, %arg5: memref<16x256xf32, #tpu.memory_space<vmem>>, %arg6: memref<32x256xf32, #tpu.memory_space<vmem>>) attributes {dimension_semantics = [#tpu.dimension_semantics<parallel>, #tpu.dimension_semantics<parallel>], iteration_bounds = array<i64: 2, 1>, scalar_prefetch = 0 : i64, scratch_operands = 0 : i64, tpu.core_type = #tpu.core_type<tc>, window_params = [{transform_indices = @transform_0, window_bounds = array<i64: 32, 16>}, {transform_indices = @transform_1, window_bounds = array<i64: 32, 16>}, {pipeline_mode = #tpu.pipeline_mode<synchronous>, transform_indices = @transform_2, window_bounds = array<i64: 16, 256>}, {pipeline_mode = #tpu.pipeline_mode<synchronous>, transform_indices = @transform_3, window_bounds = array<i64: 16, 256>}, {transform_indices = @transform_4, window_bounds = array<i64: 32, 256>}]} {
    %c0_i32 = arith.constant 0 : i32
    %0 = arith.cmpi eq, %arg0, %c0_i32 : i32
    %1 = arith.extui %0 : i1 to i32
    %c0_i32_0 = arith.constant 0 : i32
    %2 = arith.cmpi ne, %1, %c0_i32_0 : i32
    scf.if %2 {
      %c0 = arith.constant 0 : index
      %c0_2 = arith.constant 0 : index
      %6 = vector.load %arg2[%c0, %c0_2] : memref<32x16xf32, #tpu.memory_space<vmem>>, vector<32x16xf32>
      %c0_3 = arith.constant 0 : index
      %c0_4 = arith.constant 0 : index
      %7 = vector.load %arg4[%c0_3, %c0_4] : memref<16x256xf32, #tpu.memory_space<vmem>>, vector<16x256xf32>
      %cst = arith.constant dense<0.000000e+00> : vector<32x256xf32>
      %8 = tpu.matmul %6, %7, %cst {dimension_numbers = #tpu.dot_dimension_numbers<[1], [0], [0], [1], [0, 0, 1, 1], [], []>, precision = #tpu.contract_precision<fp32>} : vector<32x16xf32>, vector<16x256xf32>, vector<32x256xf32> -> vector<32x256xf32>
      %c0_5 = arith.constant 0 : index
      %c0_6 = arith.constant 0 : index
      %9 = vector.load %arg6[%c0_5, %c0_6] : memref<32x256xf32, #tpu.memory_space<vmem>>, vector<32x256xf32>
      tpu.vector_store %arg6[%c0_5, %c0_6], %8 {strides = array<i32>} : memref<32x256xf32, #tpu.memory_space<vmem>>, vector<32x256xf32>,
    } else {
    }
    %c1_i32 = arith.constant 1 : i32
    %3 = arith.cmpi eq, %arg0, %c1_i32 : i32
    %4 = arith.extui %3 : i1 to i32
    %c0_i32_1 = arith.constant 0 : i32
    %5 = arith.cmpi ne, %4, %c0_i32_1 : i32
    scf.if %5 {
      %c0 = arith.constant 0 : index
      %c0_2 = arith.constant 0 : index
      %6 = vector.load %arg3[%c0, %c0_2] : memref<32x16xf32, #tpu.memory_space<vmem>>, vector<32x16xf32>
      %c0_3 = arith.constant 0 : index
      %c0_4 = arith.constant 0 : index
      %7 = vector.load %arg5[%c0_3, %c0_4] : memref<16x256xf32, #tpu.memory_space<vmem>>, vector<16x256xf32>
      %cst = arith.constant dense<0.000000e+00> : vector<32x256xf32>
      %8 = tpu.matmul %6, %7, %cst {dimension_numbers = #tpu.dot_dimension_numbers<[1], [0], [0], [1], [0, 0, 1, 1], [], []>, precision = #tpu.contract_precision<fp32>} : vector<32x16xf32>, vector<16x256xf32>, vector<32x256xf32> -> vector<32x256xf32>
      %c0_5 = arith.constant 0 : index
      %c0_6 = arith.constant 0 : index
      %9 = vector.load %arg6[%c0_5, %c0_6] : memref<32x256xf32, #tpu.memory_space<vmem>>, vector<32x256xf32>
      tpu.vector_store %arg6[%c0_5, %c0_6], %8 {strides = array<i32>} : memref<32x256xf32, #tpu.memory_space<vmem>>, vector<32x256xf32>,
    } else {
    }
    return
  }
  func.func @transform_0(%arg0: i32, %arg1: i32) -> (i32, i32) {
    %c0_i32 = arith.constant 0 : i32
    %c0_i32_0 = arith.constant 0 : i32
    return %arg1, %c0_i32 : i32, i32
  }
  func.func @transform_1(%arg0: i32, %arg1: i32) -> (i32, i32) {
    %c0_i32 = arith.constant 0 : i32
    %c0_i32_0 = arith.constant 0 : i32
    return %arg1, %c0_i32 : i32, i32
  }
  func.func @transform_2(%arg0: i32, %arg1: i32) -> (i32, i32) {
    %c0_i32 = arith.constant 0 : i32
    %c0_i32_0 = arith.constant 0 : i32
    %c0_i32_1 = arith.constant 0 : i32
    return %c0_i32, %c0_i32_0 : i32, i32
  }
  func.func @transform_3(%arg0: i32, %arg1: i32) -> (i32, i32) {
    %c0_i32 = arith.constant 0 : i32
    %c0_i32_0 = arith.constant 0 : i32
    %c0_i32_1 = arith.constant 0 : i32
    return %c0_i32, %c0_i32_0 : i32, i32
  }
  func.func @transform_4(%arg0: i32, %arg1: i32) -> (i32, i32) {
    %c1_i32 = arith.constant 1 : i32
    %0 = arith.muli %arg0, %c1_i32 : i32
    %1 = arith.addi %0, %arg1 : i32
    %c0_i32 = arith.constant 0 : i32
    %c0_i32_0 = arith.constant 0 : i32
    return %1, %c0_i32 : i32, i32
  }
}

</mosaic_0001>

<llo_original>
// kernel: position_embedding_learned.1
$region0: #{position_embedding_learned.1}
  #allocation0 [shape = 'u32[]', space=smem, size = 0x4, offset = 0x4, fixed_abs, tag = 'smem constant byte address 0x4 - core index']
  #allocation1 [shape = 'u32[144,128]{1,0:T(1,128)}', space=vmem, size = 0x12000, scoped, tag = 'internal scratch']
  %s0 = inlined_call_operand.vmem [shape: f32[32,16], index: 0, kind: input, shape index: {}]
  %s1 = inlined_call_operand.vmem [shape: f32[32,16], index: 1, kind: input, shape index: {}]
  %s2 = inlined_call_operand.vmem [shape: f32[16,256], index: 2, kind: input, shape index: {}]
  %s3 = inlined_call_operand.vmem [shape: f32[16,256], index: 3, kind: input, shape index: {}]
  %s4 = inlined_call_operand.vmem [shape: f32[64,256], index: 4, kind: output, shape index: {}]
  %s5 = sld [smem:[#allocation0]]
  $region57: #{position_embedding_learned.1} parent=0
    _
  %s7 = ssub.s32 1, %s5
  %s8 = scalar_select 0, %s7, %s5
  loop: start=0, step=1, limit=4
  $region2: #{position_embedding_learned.1} parent=0 // loop_pre_header
    _
  $region3: #{position_embedding_learned.1} parent=0 // loop_header
    %s10 = sphi 0, %s14
    %p11 = scmp.ge.s32.totalorder %s10, 4
    %s17 = sphi 0, %s29
    %s18 = sphi 0, %s25
    %s19 = sphi 0, %s17
    %s20 = sphi 0, %s18
    %s21 = sphi 0, %s19
    %s22 = sphi 0, %s20
    %s32 = sphi 0, %s34
    %s35 = sphi 0, %s32
    %s36 = sphi 0, %s35
    %s52 = sphi 0, %s36
    %s58 = sphi 0, %s60
    %s61 = sphi 0, %s58
    %s62 = sphi 0, %s61
    %s78 = sphi 0, %s62
    %s82 = sphi 0, %s82
    %s84 = sphi 0, %s82
    %s85 = sphi 0, %s84
    %s99 = sphi 0, %s85
    %s103 = sphi 0, %s103
    %s105 = sphi 0, %s103
    %s106 = sphi 0, %s105
    %s120 = sphi 0, %s106
    %s128 = sphi 0, %s130
    %s131 = sphi 0, %s128
    %s132 = sphi 0, %s131
    %s148 = sphi 0, %s132
  $region4: #{position_embedding_learned.1} parent=0 // loop_header_branch
    %13 = sbr.rel (%p11) target = $region8
  $region5: #{position_embedding_learned.1} parent=0 // loop_body
    %s15 = ssub.s32 %s10, 1
    %s16 = ssub.s32 %s10, 2
    %s23 = sadd.s32 1, %s18
    %p24 = scmp.ge.s32.totalorder %s23, 1
    %s25 = scalar_select %p24, 0, %s23
    %s26 = sadd.s32 1, %s17
    %s27 = scalar_select %p24, %s26, %s17
    %p28 = scmp.ge.s32.totalorder %s27, 2
    %s29 = scalar_select %p28, 0, %s27
    %s30 = ssub.s32 %s18, %s25
    %p31 = scmp.eq.s32.totalorder %s30, 0
    %s33 = sadd.s32 %s32, 1
    %s34 = scalar_select %p31, %s32, %s33
    %p37 = pneg %p31
    %p38 = scmp.eq.s32.totalorder %s10, 1
    %p39 = por %p37, %p38
    %p40 = scmp.ne.s32.totalorder %s32, %s35
    %p41 = scmp.eq.s32.totalorder %s10, 0
    %p42 = por %p40, %p41
    %p43 = scmp.ne.s32.totalorder %s32, %s35
    %p44 = scmp.eq.s32.totalorder %s15, 1
    %p45 = por %p43, %p44
    %p46 = scmp.ne.s32.totalorder %s35, %s36
    %p47 = scmp.eq.s32.totalorder %s15, 0
    %p48 = por %p46, %p47
    %p49 = scmp.ne.s32.totalorder %s35, %s36
    %p50 = scmp.eq.s32.totalorder %s16, 1
    %p51 = por %p49, %p50
    %p53 = scmp.ne.s32.totalorder %s36, %s52
    %p54 = scmp.eq.s32.totalorder %s16, 0
    %p55 = por %p53, %p54
    %s56 = ssub.s32 %s18, %s25
    %p57 = scmp.eq.s32.totalorder %s56, 0
    %s59 = sadd.s32 %s58, 1
    %s60 = scalar_select %p57, %s58, %s59
    %p63 = pneg %p57
    %p64 = scmp.eq.s32.totalorder %s10, 1
    %p65 = por %p63, %p64
    %p66 = scmp.ne.s32.totalorder %s58, %s61
    %p67 = scmp.eq.s32.totalorder %s10, 0
    %p68 = por %p66, %p67
    %p69 = scmp.ne.s32.totalorder %s58, %s61
    %p70 = scmp.eq.s32.totalorder %s15, 1
    %p71 = por %p69, %p70
    %p72 = scmp.ne.s32.totalorder %s61, %s62
    %p73 = scmp.eq.s32.totalorder %s15, 0
    %p74 = por %p72, %p73
    %p75 = scmp.ne.s32.totalorder %s61, %s62
    %p76 = scmp.eq.s32.totalorder %s16, 1
    %p77 = por %p75, %p76
    %p79 = scmp.ne.s32.totalorder %s62, %s78
    %p80 = scmp.eq.s32.totalorder %s16, 0
    %p81 = por %p79, %p80
    %s83 = sadd.s32 %s82, 1
    %p86 = scmp.eq.s32.totalorder %s10, 1
    %p87 = scmp.ne.s32.totalorder %s82, %s84
    %p88 = scmp.eq.s32.totalorder %s10, 0
    %p89 = por %p87, %p88
    %p90 = scmp.ne.s32.totalorder %s82, %s84
    %p91 = scmp.eq.s32.totalorder %s15, 1
    %p92 = por %p90, %p91
    %p93 = scmp.ne.s32.totalorder %s84, %s85
    %p94 = scmp.eq.s32.totalorder %s15, 0
    %p95 = por %p93, %p94
    %p96 = scmp.ne.s32.totalorder %s84, %s85
    %p97 = scmp.eq.s32.totalorder %s16, 1
    %p98 = por %p96, %p97
    %p100 = scmp.ne.s32.totalorder %s85, %s99
    %p101 = scmp.eq.s32.totalorder %s16, 0
    %p102 = por %p100, %p101
    %s104 = sadd.s32 %s103, 1
    %p107 = scmp.eq.s32.totalorder %s10, 1
    %p108 = scmp.ne.s32.totalorder %s103, %s105
    %p109 = scmp.eq.s32.totalorder %s10, 0
    %p110 = por %p108, %p109
    %p111 = scmp.ne.s32.totalorder %s103, %s105
    %p112 = scmp.eq.s32.totalorder %s15, 1
    %p113 = por %p111, %p112
    %p114 = scmp.ne.s32.totalorder %s105, %s106
    %p115 = scmp.eq.s32.totalorder %s15, 0
    %p116 = por %p114, %p115
    %p117 = scmp.ne.s32.totalorder %s105, %s106
    %p118 = scmp.eq.s32.totalorder %s16, 1
    %p119 = por %p117, %p118
    %p121 = scmp.ne.s32.totalorder %s106, %s120
    %p122 = scmp.eq.s32.totalorder %s16, 0
    %p123 = por %p121, %p122
    %s124 = sadd.s32 %s17, %s18
    %s125 = sadd.s32 %s29, %s25
    %s126 = ssub.s32 %s124, %s125
    %p127 = scmp.eq.s32.totalorder %s126, 0
    %s129 = sadd.s32 %s128, 1
    %s130 = scalar_select %p127, %s128, %s129
    %p133 = pneg %p127
    %p134 = scmp.eq.s32.totalorder %s10, 1
    %p135 = por %p133, %p134
    %p136 = scmp.ne.s32.totalorder %s128, %s131
    %p137 = scmp.eq.s32.totalorder %s10, 0
    %p138 = por %p136, %p137
    %p139 = scmp.ne.s32.totalorder %s128, %s131
    %p140 = scmp.eq.s32.totalorder %s15, 1
    %p141 = por %p139, %p140
    %p142 = scmp.ne.s32.totalorder %s131, %s132
    %p143 = scmp.eq.s32.totalorder %s15, 0
    %p144 = por %p142, %p143
    %p145 = scmp.ne.s32.totalorder %s131, %s132
    %p146 = scmp.eq.s32.totalorder %s16, 1
    %p147 = por %p145, %p146
    %p149 = scmp.ne.s32.totalorder %s132, %s148
    %p150 = scmp.eq.s32.totalorder %s16, 0
    %p151 = por %p149, %p150
    %p152 = scmp.le.s32.totalorder 1, %s10
    %p153 = scmp.lt.s32.totalorder %s10, 3
    %p154 = pnand %p152, %p153
    %p155 = pneg %p154
    // Predicated region
    $region9: #{position_embedding_learned.1} parent=5 // pred_check
      _
    $region10: #{position_embedding_learned.1} parent=5 // pred_check_branch
      %157 = sbr.rel (%p154) target = $region12
    $region11: #{position_embedding_learned.1} parent=5 // pred_region
      %s158 = ssub.s32 %s10, 1
      // Predicated region
      $region13: #{position_embedding_learned.1} parent=11 // pred_check
        %p159 = pneg %p48
      $region14: #{position_embedding_learned.1} parent=11 // pred_check_branch
        %161 = sbr.rel (%p159) target = $region16
      $region15: #{position_embedding_learned.1} parent=11 // pred_region
        %s162 = smul.u32 4, %s20
        %p163 = scmp.lt.s32.totalorder %s162, 3
        %s164 = scalar_select %p163, %s162, 3
        %s165 = smul.addr %s164, 8
        %s166 = scalar_lea.vmem %s0, %s165
        %s167 = smul.u32 4, %s20
      $region16: #{position_embedding_learned.1} parent=11 // pred_fallthru
        _
      // Predicated region
      $region17: #{position_embedding_learned.1} parent=11 // pred_check
        %p168 = pneg %p74
      $region18: #{position_embedding_learned.1} parent=11 // pred_check_branch
        %170 = sbr.rel (%p168) target = $region20
      $region19: #{position_embedding_learned.1} parent=11 // pred_region
        %s171 = smul.u32 4, %s20
        %p172 = scmp.lt.s32.totalorder %s171, 3
        %s173 = scalar_select %p172, %s171, 3
        %s174 = smul.addr %s173, 8
        %s175 = scalar_lea.vmem %s1, %s174
        %s176 = smul.u32 4, %s20
      $region20: #{position_embedding_learned.1} parent=11 // pred_fallthru
        _
      // Predicated region
      $region21: #{position_embedding_learned.1} parent=11 // pred_check
        %p177 = pneg %p95
      $region22: #{position_embedding_learned.1} parent=11 // pred_check_branch
        %179 = sbr.rel (%p177) target = $region24
      $region23: #{position_embedding_learned.1} parent=11 // pred_region
        _
      $region24: #{position_embedding_learned.1} parent=11 // pred_fallthru
        _
      // Predicated region
      $region25: #{position_embedding_learned.1} parent=11 // pred_check
        %p180 = pneg %p116
      $region26: #{position_embedding_learned.1} parent=11 // pred_check_branch
        %182 = sbr.rel (%p180) target = $region28
      $region27: #{position_embedding_learned.1} parent=11 // pred_region
        _
      $region28: #{position_embedding_learned.1} parent=11 // pred_fallthru
        _
    $region12: #{position_embedding_learned.1} parent=5 // pred_fallthru
      _
    %p183 = scmp.lt.s32.totalorder %s10, 2
    // Predicated region
    $region29: #{position_embedding_learned.1} parent=5 // pred_check
      %p184 = pneg %p183
    $region30: #{position_embedding_learned.1} parent=5 // pred_check_branch
      %186 = sbr.rel (%p184) target = $region32
    $region31: #{position_embedding_learned.1} parent=5 // pred_region
      _
    $region32: #{position_embedding_learned.1} parent=5 // pred_fallthru
      _
    %p187 = scmp.le.s32.totalorder 1, %s10
    %p188 = scmp.lt.s32.totalorder %s10, 3
    %p189 = pnand %p187, %p188
    %p190 = pneg %p189
    // Predicated region
    $region33: #{position_embedding_learned.1} parent=5 // pred_check
      _
    $region34: #{position_embedding_learned.1} parent=5 // pred_check_branch
      %192 = sbr.rel (%p189) target = $region36
    $region35: #{position_embedding_learned.1} parent=5 // pred_region
      %s193 = ssub.s32 %s10, 1
      %s194 = smul.u32 4, %s20
      %p195 = scmp.lt.s32.totalorder %s194, 3
      %s196 = scalar_select %p195, %s194, 3
      %s197 = smul.addr %s196, 8
      %s198 = scalar_lea.vmem %s0, %s197
      %p199 = pneg %p48
      %p200 = pneg %p45
      %s201 = smul.u32 4, %s20
      %p202 = scmp.lt.s32.totalorder %s201, 3
      %s203 = scalar_select %p202, %s201, 3
      %s204 = smul.addr %s203, 8
      %s205 = scalar_lea.vmem %s1, %s204
      %p206 = pneg %p74
      %p207 = pneg %p71
      %p208 = pneg %p95
      %p209 = pneg %p92
      %p210 = pneg %p116
      %p211 = pneg %p113
      %p212 = pneg %p144
      %p213 = pneg %p141
      %s214 = sadd.s32 %s19, %s20
      %s215 = smul.u32 4, %s214
      %p216 = scmp.lt.s32.totalorder %s215, 7
      %s217 = scalar_select %p216, %s215, 7
      %s218 = smul.addr %s217, 2
      %s219 = smul.addr %s218, 8
      %s220 = scalar_lea.vmem %s4, %s219
      %s221 = smul.u32 4, %s20
      %p222 = scmp.lt.s32.totalorder %s221, 3
      %s223 = scalar_select %p222, %s221, 3
      %s224 = smul.addr %s223, 8
      %s225 = scalar_lea.vmem %s0, %s224
      %s226 = smul.u32 4, %s20
      %s227 = smul.u32 4, %s20
      %p228 = scmp.lt.s32.totalorder %s227, 3
      %s229 = scalar_select %p228, %s227, 3
      %s230 = smul.addr %s229, 8
      %s231 = scalar_lea.vmem %s1, %s230
      %s232 = smul.u32 4, %s20
      %s233 = sadd.s32 %s19, %s20
      %s234 = smul.u32 4, %s233
      %p235 = scmp.lt.s32.totalorder %s234, 7
      %s236 = scalar_select %p235, %s234, 7
      %s237 = smul.addr %s236, 2
      %s238 = smul.addr %s237, 8
      %s239 = scalar_lea.vmem %s4, %s238
      %s240 = sadd.s32 %s19, %s20
      %s241 = smul.u32 4, %s240
      %p242 = scmp.eq.s32.totalorder %s19, 0
      // Predicated region
      $region37: #{position_embedding_learned.1} parent=35 // pred_check
        %p243 = pneg %p242
      $region38: #{position_embedding_learned.1} parent=35 // pred_check_branch
        %245 = sbr.rel (%p243) target = $region40
      $region39: #{position_embedding_learned.1} parent=35 // pred_region
        %v246 = vld [vmem:[%s225] sm:$0xff]
        %v247 = vld [vmem:[%s225 + $0x8] sm:$0xff]
        %v248 = vld [vmem:[%s225 + $0x10] sm:$0xff]
        %v249 = vld [vmem:[%s225 + $0x18] sm:$0xff]
        %v250 = vld [vmem:[%s2] sm:$0xff]
        %v251 = vld [vmem:[%s2 + $0x8] sm:$0xff]
        %v252 = vld [vmem:[%s2 + $0x10] sm:$0xff]
        %v253 = vld [vmem:[%s2 + $0x18] sm:$0xff]
        %vm254 = vcmask 130048
        %v256 = vsel %vm254, %v246, 0
        %v259 = vsel %vm254, %v247, 0
        %v262 = vsel %vm254, %v248, 0
        %v265 = vsel %vm254, %v249, 0
        %267 = vmatprep.subr.mxu0 0.0
        %268 = vmatpush1.msra.mxu0 0.0
        %269 = vmatprep.subr.mxu0 0.0
        %270 = vmatpush1.msra.mxu0 0.0
        %271 = vmatprep.subr.mxu0 0.0
        %272 = vmatpush1.msra.mxu0 0.0
        %273 = vmatprep.subr.mxu0 0.0
        %274 = vmatpush1.msra.mxu0 0.0
        %275 = vmatprep.subr.mxu0 0.0
        %276 = vmatpush1.msra.mxu0 0.0
        %277 = vmatprep.subr.mxu0 0.0
        %278 = vmatpush1.msra.mxu0 0.0
        %279 = vmatprep.subr.mxu0 0.0
        %280 = vmatpush1.msra.mxu0 0.0
        %281 = vmatprep.subr.mxu0 0.0
        %282 = vmatpush1.msra.mxu0 0.0
        %283 = vmatprep.subr.mxu0 0.0
        %284 = vmatpush1.msra.mxu0 0.0
        %285 = vmatprep.subr.mxu0 0.0
        %286 = vmatpush1.msra.mxu0 0.0
        %287 = vmatprep.subr.mxu0 0.0
        %288 = vmatpush1.msra.mxu0 0.0
        %289 = vmatprep.subr.mxu0 0.0
        %290 = vmatpush1.msra.mxu0 0.0
        %291 = vmatprep.subr.mxu0 0.0
        %292 = vmatpush1.msra.mxu0 0.0
        %293 = vmatprep.subr.mxu0 0.0
        %294 = vmatpush1.msra.mxu0 0.0
        %v295 = vand.u32 %v253, 4294901760
        %296 = vmatprep.subr.mxu0 %v295
        %v297 = vand.u32 %v252, 4294901760
        %298 = vmatpush1.msra.mxu0 %v297
        %v299 = vand.u32 %v251, 4294901760
        %300 = vmatprep.subr.mxu0 %v299
        %v301 = vand.u32 %v250, 4294901760
        %302 = vmatpush1.msra.mxu0 %v301
        %303 = vmatprep.subr.mxu0 0.0
        %304 = vmatpush2.msra.mxu0 0.0
        %305 = vmatprep.subr.mxu0 0.0
        %306 = vmatpush2.msra.mxu0 0.0
        %307 = vmatprep.subr.mxu0 0.0
        %308 = vmatpush2.msra.mxu0 0.0
        %309 = vmatprep.subr.mxu0 0.0
        %310 = vmatpush2.msra.mxu0 0.0
        %311 = vmatprep.subr.mxu0 0.0
        %312 = vmatpush2.msra.mxu0 0.0
        %313 = vmatprep.subr.mxu0 0.0
        %314 = vmatpush2.msra.mxu0 0.0
        %315 = vmatprep.subr.mxu0 0.0
        %316 = vmatpush2.msra.mxu0 0.0
        %317 = vmatprep.subr.mxu0 0.0
        %318 = vmatpush2.msra.mxu0 0.0
        %319 = vmatprep.subr.mxu0 0.0
        %320 = vmatpush2.msra.mxu0 0.0
        %321 = vmatprep.subr.mxu0 0.0
        %322 = vmatpush2.msra.mxu0 0.0
        %323 = vmatprep.subr.mxu0 0.0
        %324 = vmatpush2.msra.mxu0 0.0
        %325 = vmatprep.subr.mxu0 0.0
        %326 = vmatpush2.msra.mxu0 0.0
        %327 = vmatprep.subr.mxu0 0.0
        %328 = vmatpush2.msra.mxu0 0.0
        %329 = vmatprep.subr.mxu0 0.0
        %330 = vmatpush2.msra.mxu0 0.0
        %331 = vmatprep.subr.mxu0 0.0
        %332 = vmatpush2.msra.mxu0 0.0
        %333 = vmatprep.subr.mxu0 0.0
        %334 = vmatpush2.msra.mxu0 0.0
        %335 = vmatprep.mubr.f32.mxu0 0.0
        %v336 = vand.u32 %v256, 4294901760
        %v337 = vsub.f32 %v256, %v336
        %v338 = vand.u32 %v337, 4294901760
        %v339 = vsub.f32 %v337, %v338
        %v340 = vand.u32 %v339, 4294901760
        %341 = vmatmul.mubr.f32.gmra.mxu0 %v340
        %v342 = vpop.f32.mrf.mxu0
        %v343 = vadd.f32 0.0, %v342
        %v344 = vpop.f32.mrf.mxu0
        %v345 = vadd.f32 0.0, %v344
        %346 = vmatprep.mubr.f32.mxu0 0.0
        %v347 = vand.u32 %v259, 4294901760
        %v348 = vsub.f32 %v259, %v347
        %v349 = vand.u32 %v348, 4294901760
        %v350 = vsub.f32 %v348, %v349
        %v351 = vand.u32 %v350, 4294901760
        %352 = vmatmul.mubr.f32.gmra.mxu0 %v351
        %v353 = vpop.f32.mrf.mxu0
        %v354 = vadd.f32 0.0, %v353
        %v355 = vpop.f32.mrf.mxu0
        %v356 = vadd.f32 0.0, %v355
        %357 = vmatprep.mubr.f32.mxu0 0.0
        %v358 = vand.u32 %v262, 4294901760
        %v359 = vsub.f32 %v262, %v358
        %v360 = vand.u32 %v359, 4294901760
        %v361 = vsub.f32 %v359, %v360
        %v362 = vand.u32 %v361, 4294901760
        %363 = vmatmul.mubr.f32.gmra.mxu0 %v362
        %v364 = vpop.f32.mrf.mxu0
        %v365 = vadd.f32 0.0, %v364
        %v366 = vpop.f32.mrf.mxu0
        %v367 = vadd.f32 0.0, %v366
        %368 = vmatprep.mubr.f32.mxu0 0.0
        %v369 = vand.u32 %v265, 4294901760
        %v370 = vsub.f32 %v265, %v369
        %v371 = vand.u32 %v370, 4294901760
        %v372 = vsub.f32 %v370, %v371
        %v373 = vand.u32 %v372, 4294901760
        %374 = vmatmul.mubr.f32.gmra.mxu0 %v373
        %v375 = vpop.f32.mrf.mxu0
        %v376 = vadd.f32 0.0, %v375
        %v377 = vpop.f32.mrf.mxu0
        %v378 = vadd.f32 0.0, %v377
        %379 = vdwg.mxu0
        %380 = vmatprep.subr.mxu0 0.0
        %381 = vmatpush1.msra.mxu0 0.0
        %382 = vmatprep.subr.mxu0 0.0
        %383 = vmatpush1.msra.mxu0 0.0
        %384 = vmatprep.subr.mxu0 0.0
        %385 = vmatpush1.msra.mxu0 0.0
        %386 = vmatprep.subr.mxu0 0.0
        %387 = vmatpush1.msra.mxu0 0.0
        %388 = vmatprep.subr.mxu0 0.0
        %389 = vmatpush1.msra.mxu0 0.0
        %390 = vmatprep.subr.mxu0 0.0
        %391 = vmatpush1.msra.mxu0 0.0
        %392 = vmatprep.subr.mxu0 0.0
        %393 = vmatpush1.msra.mxu0 0.0
        %394 = vmatprep.subr.mxu0 0.0
        %395 = vmatpush1.msra.mxu0 0.0
        %396 = vmatprep.subr.mxu0 0.0
        %397 = vmatpush1.msra.mxu0 0.0
        %398 = vmatprep.subr.mxu0 0.0
        %399 = vmatpush1.msra.mxu0 0.0
        %400 = vmatprep.subr.mxu0 0.0
        %401 = vmatpush1.msra.mxu0 0.0
        %402 = vmatprep.subr.mxu0 0.0
        %403 = vmatpush1.msra.mxu0 0.0
        %404 = vmatprep.subr.mxu0 0.0
        %405 = vmatpush1.msra.mxu0 0.0
        %406 = vmatprep.subr.mxu0 0.0
        %407 = vmatpush1.msra.mxu0 0.0
        %v408 = vand.u32 %v253, 4294901760
        %v409 = vsub.f32 %v253, %v408
        %v410 = vand.u32 %v409, 4294901760
        %v411 = vsub.f32 %v409, %v410
        %v412 = vand.u32 %v411, 4294901760
        %413 = vmatprep.subr.mxu0 %v412
        %v414 = vand.u32 %v252, 4294901760
        %v415 = vsub.f32 %v252, %v414
        %v416 = vand.u32 %v415, 4294901760
        %v417 = vsub.f32 %v415, %v416
        %v418 = vand.u32 %v417, 4294901760
        %419 = vmatpush1.msra.mxu0 %v418
        %v420 = vand.u32 %v251, 4294901760
        %v421 = vsub.f32 %v251, %v420
        %v422 = vand.u32 %v421, 4294901760
        %v423 = vsub.f32 %v421, %v422
        %v424 = vand.u32 %v423, 4294901760
        %425 = vmatprep.subr.mxu0 %v424
        %v426 = vand.u32 %v250, 4294901760
        %v427 = vsub.f32 %v250, %v426
        %v428 = vand.u32 %v427, 4294901760
        %v429 = vsub.f32 %v427, %v428
        %v430 = vand.u32 %v429, 4294901760
        %431 = vmatpush1.msra.mxu0 %v430
        %432 = vmatprep.subr.mxu0 0.0
        %433 = vmatpush2.msra.mxu0 0.0
        %434 = vmatprep.subr.mxu0 0.0
        %435 = vmatpush2.msra.mxu0 0.0
        %436 = vmatprep.subr.mxu0 0.0
        %437 = vmatpush2.msra.mxu0 0.0
        %438 = vmatprep.subr.mxu0 0.0
        %439 = vmatpush2.msra.mxu0 0.0
        %440 = vmatprep.subr.mxu0 0.0
        %441 = vmatpush2.msra.mxu0 0.0
        %442 = vmatprep.subr.mxu0 0.0
        %443 = vmatpush2.msra.mxu0 0.0
        %444 = vmatprep.subr.mxu0 0.0
        %445 = vmatpush2.msra.mxu0 0.0
        %446 = vmatprep.subr.mxu0 0.0
        %447 = vmatpush2.msra.mxu0 0.0
        %448 = vmatprep.subr.mxu0 0.0
        %449 = vmatpush2.msra.mxu0 0.0
        %450 = vmatprep.subr.mxu0 0.0
        %451 = vmatpush2.msra.mxu0 0.0
        %452 = vmatprep.subr.mxu0 0.0
        %453 = vmatpush2.msra.mxu0 0.0
        %454 = vmatprep.subr.mxu0 0.0
        %455 = vmatpush2.msra.mxu0 0.0
        %456 = vmatprep.subr.mxu0 0.0
        %457 = vmatpush2.msra.mxu0 0.0
        %458 = vmatprep.subr.mxu0 0.0
        %459 = vmatpush2.msra.mxu0 0.0
        %460 = vmatprep.subr.mxu0 0.0
        %461 = vmatpush2.msra.mxu0 0.0
        %462 = vmatprep.subr.mxu0 0.0
        %463 = vmatpush2.msra.mxu0 0.0
        %464 = vmatprep.mubr.f32.mxu0 0.0
        %v465 = vand.u32 %v256, 4294901760
        %466 = vmatmul.mubr.f32.gmra.mxu0 %v465
        %v467 = vpop.f32.mrf.mxu0
        %v468 = vadd.f32 %v343, %v467
        %v469 = vpop.f32.mrf.mxu0
        %v470 = vadd.f32 %v345, %v469
        %471 = vmatprep.mubr.f32.mxu0 0.0
        %v472 = vand.u32 %v259, 4294901760
        %473 = vmatmul.mubr.f32.gmra.mxu0 %v472
        %v474 = vpop.f32.mrf.mxu0
        %v475 = vadd.f32 %v354, %v474
        %v476 = vpop.f32.mrf.mxu0
        %v477 = vadd.f32 %v356, %v476
        %478 = vmatprep.mubr.f32.mxu0 0.0
        %v479 = vand.u32 %v262, 4294901760
        %480 = vmatmul.mubr.f32.gmra.mxu0 %v479
        %v481 = vpop.f32.mrf.mxu0
        %v482 = vadd.f32 %v365, %v481
        %v483 = vpop.f32.mrf.mxu0
        %v484 = vadd.f32 %v367, %v483
        %485 = vmatprep.mubr.f32.mxu0 0.0
        %v486 = vand.u32 %v265, 4294901760
        %487 = vmatmul.mubr.f32.gmra.mxu0 %v486
        %v488 = vpop.f32.mrf.mxu0
        %v489 = vadd.f32 %v376, %v488
        %v490 = vpop.f32.mrf.mxu0
        %v491 = vadd.f32 %v378, %v490
        %492 = vdwg.mxu0
        %493 = vmatprep.subr.mxu0 0.0
        %494 = vmatpush1.msra.mxu0 0.0
        %495 = vmatprep.subr.mxu0 0.0
        %496 = vmatpush1.msra.mxu0 0.0
        %497 = vmatprep.subr.mxu0 0.0
        %498 = vmatpush1.msra.mxu0 0.0
        %499 = vmatprep.subr.mxu0 0.0
        %500 = vmatpush1.msra.mxu0 0.0
        %501 = vmatprep.subr.mxu0 0.0
        %502 = vmatpush1.msra.mxu0 0.0
        %503 = vmatprep.subr.mxu0 0.0
        %504 = vmatpush1.msra.mxu0 0.0
        %505 = vmatprep.subr.mxu0 0.0
        %506 = vmatpush1.msra.mxu0 0.0
        %507 = vmatprep.subr.mxu0 0.0
        %508 = vmatpush1.msra.mxu0 0.0
        %509 = vmatprep.subr.mxu0 0.0
        %510 = vmatpush1.msra.mxu0 0.0
        %511 = vmatprep.subr.mxu0 0.0
        %512 = vmatpush1.msra.mxu0 0.0
        %513 = vmatprep.subr.mxu0 0.0
        %514 = vmatpush1.msra.mxu0 0.0
        %515 = vmatprep.subr.mxu0 0.0
        %516 = vmatpush1.msra.mxu0 0.0
        %517 = vmatprep.subr.mxu0 0.0
        %518 = vmatpush1.msra.mxu0 0.0
        %519 = vmatprep.subr.mxu0 0.0
        %520 = vmatpush1.msra.mxu0 0.0
        %v521 = vand.u32 %v253, 4294901760
        %v522 = vsub.f32 %v253, %v521
        %523 = vmatprep.subr.mxu0 %v522
        %v524 = vand.u32 %v252, 4294901760
        %v525 = vsub.f32 %v252, %v524
        %526 = vmatpush1.msra.mxu0 %v525
        %v527 = vand.u32 %v251, 4294901760
        %v528 = vsub.f32 %v251, %v527
        %529 = vmatprep.subr.mxu0 %v528
        %v530 = vand.u32 %v250, 4294901760
        %v531 = vsub.f32 %v250, %v530
        %532 = vmatpush1.msra.mxu0 %v531
        %533 = vmatprep.subr.mxu0 0.0
        %534 = vmatpush2.msra.mxu0 0.0
        %535 = vmatprep.subr.mxu0 0.0
        %536 = vmatpush2.msra.mxu0 0.0
        %537 = vmatprep.subr.mxu0 0.0
        %538 = vmatpush2.msra.mxu0 0.0
        %539 = vmatprep.subr.mxu0 0.0
        %540 = vmatpush2.msra.mxu0 0.0
        %541 = vmatprep.subr.mxu0 0.0
        %542 = vmatpush2.msra.mxu0 0.0
        %543 = vmatprep.subr.mxu0 0.0
        %544 = vmatpush2.msra.mxu0 0.0
        %545 = vmatprep.subr.mxu0 0.0
        %546 = vmatpush2.msra.mxu0 0.0
        %547 = vmatprep.subr.mxu0 0.0
        %548 = vmatpush2.msra.mxu0 0.0
        %549 = vmatprep.subr.mxu0 0.0
        %550 = vmatpush2.msra.mxu0 0.0
        %551 = vmatprep.subr.mxu0 0.0
        %552 = vmatpush2.msra.mxu0 0.0
        %553 = vmatprep.subr.mxu0 0.0
        %554 = vmatpush2.msra.mxu0 0.0
        %555 = vmatprep.subr.mxu0 0.0
        %556 = vmatpush2.msra.mxu0 0.0
        %557 = vmatprep.subr.mxu0 0.0
        %558 = vmatpush2.msra.mxu0 0.0
        %559 = vmatprep.subr.mxu0 0.0
        %560 = vmatpush2.msra.mxu0 0.0
        %561 = vmatprep.subr.mxu0 0.0
        %562 = vmatpush2.msra.mxu0 0.0
        %563 = vmatprep.subr.mxu0 0.0
        %564 = vmatpush2.msra.mxu0 0.0
        %565 = vmatprep.mubr.f32.mxu0 0.0
        %v566 = vand.u32 %v256, 4294901760
        %v567 = vsub.f32 %v256, %v566
        %568 = vmatmul.mubr.f32.gmra.mxu0 %v567
        %v569 = vpop.f32.mrf.mxu0
        %v570 = vadd.f32 %v468, %v569
        %v571 = vpop.f32.mrf.mxu0
        %v572 = vadd.f32 %v470, %v571
        %573 = vmatprep.mubr.f32.mxu0 0.0
        %v574 = vand.u32 %v259, 4294901760
        %v575 = vsub.f32 %v259, %v574
        %576 = vmatmul.mubr.f32.gmra.mxu0 %v575
        %v577 = vpop.f32.mrf.mxu0
        %v578 = vadd.f32 %v475, %v577
        %v579 = vpop.f32.mrf.mxu0
        %v580 = vadd.f32 %v477, %v579
        %581 = vmatprep.mubr.f32.mxu0 0.0
        %v582 = vand.u32 %v262, 4294901760
        %v583 = vsub.f32 %v262, %v582
        %584 = vmatmul.mubr.f32.gmra.mxu0 %v583
        %v585 = vpop.f32.mrf.mxu0
        %v586 = vadd.f32 %v482, %v585
        %v587 = vpop.f32.mrf.mxu0
        %v588 = vadd.f32 %v484, %v587
        %589 = vmatprep.mubr.f32.mxu0 0.0
        %v590 = vand.u32 %v265, 4294901760
        %v591 = vsub.f32 %v265, %v590
        %592 = vmatmul.mubr.f32.gmra.mxu0 %v591
        %v593 = vpop.f32.mrf.mxu0
        %v594 = vadd.f32 %v489, %v593
        %v595 = vpop.f32.mrf.mxu0
        %v596 = vadd.f32 %v491, %v595
        %597 = vdwg.mxu0
        %598 = vmatprep.subr.mxu0 0.0
        %599 = vmatpush1.msra.mxu0 0.0
        %600 = vmatprep.subr.mxu0 0.0
        %601 = vmatpush1.msra.mxu0 0.0
        %602 = vmatprep.subr.mxu0 0.0
        %603 = vmatpush1.msra.mxu0 0.0
        %604 = vmatprep.subr.mxu0 0.0
        %605 = vmatpush1.msra.mxu0 0.0
        %606 = vmatprep.subr.mxu0 0.0
        %607 = vmatpush1.msra.mxu0 0.0
        %608 = vmatprep.subr.mxu0 0.0
        %609 = vmatpush1.msra.mxu0 0.0
        %610 = vmatprep.subr.mxu0 0.0
        %611 = vmatpush1.msra.mxu0 0.0
        %612 = vmatprep.subr.mxu0 0.0
        %613 = vmatpush1.msra.mxu0 0.0
        %614 = vmatprep.subr.mxu0 0.0
        %615 = vmatpush1.msra.mxu0 0.0
        %616 = vmatprep.subr.mxu0 0.0
        %617 = vmatpush1.msra.mxu0 0.0
        %618 = vmatprep.subr.mxu0 0.0
        %619 = vmatpush1.msra.mxu0 0.0
        %620 = vmatprep.subr.mxu0 0.0
        %621 = vmatpush1.msra.mxu0 0.0
        %622 = vmatprep.subr.mxu0 0.0
        %623 = vmatpush1.msra.mxu0 0.0
        %624 = vmatprep.subr.mxu0 0.0
        %625 = vmatpush1.msra.mxu0 0.0
        %v626 = vand.u32 %v253, 4294901760
        %627 = vmatprep.subr.mxu0 %v626
        %v628 = vand.u32 %v252, 4294901760
        %629 = vmatpush1.msra.mxu0 %v628
        %v630 = vand.u32 %v251, 4294901760
        %631 = vmatprep.subr.mxu0 %v630
        %v632 = vand.u32 %v250, 4294901760
        %633 = vmatpush1.msra.mxu0 %v632
        %634 = vmatprep.subr.mxu0 0.0
        %635 = vmatpush2.msra.mxu0 0.0
        %636 = vmatprep.subr.mxu0 0.0
        %637 = vmatpush2.msra.mxu0 0.0
        %638 = vmatprep.subr.mxu0 0.0
        %639 = vmatpush2.msra.mxu0 0.0
        %640 = vmatprep.subr.mxu0 0.0
        %641 = vmatpush2.msra.mxu0 0.0
        %642 = vmatprep.subr.mxu0 0.0
        %643 = vmatpush2.msra.mxu0 0.0
        %644 = vmatprep.subr.mxu0 0.0
        %645 = vmatpush2.msra.mxu0 0.0
        %646 = vmatprep.subr.mxu0 0.0
        %647 = vmatpush2.msra.mxu0 0.0
        %648 = vmatprep.subr.mxu0 0.0
        %649 = vmatpush2.msra.mxu0 0.0
        %650 = vmatprep.subr.mxu0 0.0
        %651 = vmatpush2.msra.mxu0 0.0
        %652 = vmatprep.subr.mxu0 0.0
        %653 = vmatpush2.msra.mxu0 0.0
        %654 = vmatprep.subr.mxu0 0.0
        %655 = vmatpush2.msra.mxu0 0.0
        %656 = vmatprep.subr.mxu0 0.0
        %657 = vmatpush2.msra.mxu0 0.0
        %658 = vmatprep.subr.mxu0 0.0
        %659 = vmatpush2.msra.mxu0 0.0
        %660 = vmatprep.subr.mxu0 0.0
        %661 = vmatpush2.msra.mxu0 0.0
        %662 = vmatprep.subr.mxu0 0.0
        %663 = vmatpush2.msra.mxu0 0.0
        %664 = vmatprep.subr.mxu0 0.0
        %665 = vmatpush2.msra.mxu0 0.0
        %666 = vmatprep.mubr.f32.mxu0 0.0
        %v667 = vand.u32 %v256, 4294901760
        %v668 = vsub.f32 %v256, %v667
        %v669 = vand.u32 %v668, 4294901760
        %670 = vmatmul.mubr.f32.gmra.mxu0 %v669
        %v671 = vpop.f32.mrf.mxu0
        %v672 = vadd.f32 %v570, %v671
        %v673 = vpop.f32.mrf.mxu0
        %v674 = vadd.f32 %v572, %v673
        %675 = vmatprep.mubr.f32.mxu0 0.0
        %v676 = vand.u32 %v259, 4294901760
        %v677 = vsub.f32 %v259, %v676
        %v678 = vand.u32 %v677, 4294901760
        %679 = vmatmul.mubr.f32.gmra.mxu0 %v678
        %v680 = vpop.f32.mrf.mxu0
        %v681 = vadd.f32 %v578, %v680
        %v682 = vpop.f32.mrf.mxu0
        %v683 = vadd.f32 %v580, %v682
        %684 = vmatprep.mubr.f32.mxu0 0.0
        %v685 = vand.u32 %v262, 4294901760
        %v686 = vsub.f32 %v262, %v685
        %v687 = vand.u32 %v686, 4294901760
        %688 = vmatmul.mubr.f32.gmra.mxu0 %v687
        %v689 = vpop.f32.mrf.mxu0
        %v690 = vadd.f32 %v586, %v689
        %v691 = vpop.f32.mrf.mxu0
        %v692 = vadd.f32 %v588, %v691
        %693 = vmatprep.mubr.f32.mxu0 0.0
        %v694 = vand.u32 %v265, 4294901760
        %v695 = vsub.f32 %v265, %v694
        %v696 = vand.u32 %v695, 4294901760
        %697 = vmatmul.mubr.f32.gmra.mxu0 %v696
        %v698 = vpop.f32.mrf.mxu0
        %v699 = vadd.f32 %v594, %v698
        %v700 = vpop.f32.mrf.mxu0
        %v701 = vadd.f32 %v596, %v700
        %702 = vdwg.mxu0
        %703 = vmatprep.subr.mxu0 0.0
        %704 = vmatpush1.msra.mxu0 0.0
        %705 = vmatprep.subr.mxu0 0.0
        %706 = vmatpush1.msra.mxu0 0.0
        %707 = vmatprep.subr.mxu0 0.0
        %708 = vmatpush1.msra.mxu0 0.0
        %709 = vmatprep.subr.mxu0 0.0
        %710 = vmatpush1.msra.mxu0 0.0
        %711 = vmatprep.subr.mxu0 0.0
        %712 = vmatpush1.msra.mxu0 0.0
        %713 = vmatprep.subr.mxu0 0.0
        %714 = vmatpush1.msra.mxu0 0.0
        %715 = vmatprep.subr.mxu0 0.0
        %716 = vmatpush1.msra.mxu0 0.0
        %717 = vmatprep.subr.mxu0 0.0
        %718 = vmatpush1.msra.mxu0 0.0
        %719 = vmatprep.subr.mxu0 0.0
        %720 = vmatpush1.msra.mxu0 0.0
        %721 = vmatprep.subr.mxu0 0.0
        %722 = vmatpush1.msra.mxu0 0.0
        %723 = vmatprep.subr.mxu0 0.0
        %724 = vmatpush1.msra.mxu0 0.0
        %725 = vmatprep.subr.mxu0 0.0
        %726 = vmatpush1.msra.mxu0 0.0
        %727 = vmatprep.subr.mxu0 0.0
        %728 = vmatpush1.msra.mxu0 0.0
        %729 = vmatprep.subr.mxu0 0.0
        %730 = vmatpush1.msra.mxu0 0.0
        %v731 = vand.u32 %v253, 4294901760
        %v732 = vsub.f32 %v253, %v731
        %v733 = vand.u32 %v732, 4294901760
        %734 = vmatprep.subr.mxu0 %v733
        %v735 = vand.u32 %v252, 4294901760
        %v736 = vsub.f32 %v252, %v735
        %v737 = vand.u32 %v736, 4294901760
        %738 = vmatpush1.msra.mxu0 %v737
        %v739 = vand.u32 %v251, 4294901760
        %v740 = vsub.f32 %v251, %v739
        %v741 = vand.u32 %v740, 4294901760
        %742 = vmatprep.subr.mxu0 %v741
        %v743 = vand.u32 %v250, 4294901760
        %v744 = vsub.f32 %v250, %v743
        %v745 = vand.u32 %v744, 4294901760
        %746 = vmatpush1.msra.mxu0 %v745
        %747 = vmatprep.subr.mxu0 0.0
        %748 = vmatpush2.msra.mxu0 0.0
        %749 = vmatprep.subr.mxu0 0.0
        %750 = vmatpush2.msra.mxu0 0.0
        %751 = vmatprep.subr.mxu0 0.0
        %752 = vmatpush2.msra.mxu0 0.0
        %753 = vmatprep.subr.mxu0 0.0
        %754 = vmatpush2.msra.mxu0 0.0
        %755 = vmatprep.subr.mxu0 0.0
        %756 = vmatpush2.msra.mxu0 0.0
        %757 = vmatprep.subr.mxu0 0.0
        %758 = vmatpush2.msra.mxu0 0.0
        %759 = vmatprep.subr.mxu0 0.0
        %760 = vmatpush2.msra.mxu0 0.0
        %761 = vmatprep.subr.mxu0 0.0
        %762 = vmatpush2.msra.mxu0 0.0
        %763 = vmatprep.subr.mxu0 0.0
        %764 = vmatpush2.msra.mxu0 0.0
        %765 = vmatprep.subr.mxu0 0.0
        %766 = vmatpush2.msra.mxu0 0.0
        %767 = vmatprep.subr.mxu0 0.0
        %768 = vmatpush2.msra.mxu0 0.0
        %769 = vmatprep.subr.mxu0 0.0
        %770 = vmatpush2.msra.mxu0 0.0
        %771 = vmatprep.subr.mxu0 0.0
        %772 = vmatpush2.msra.mxu0 0.0
        %773 = vmatprep.subr.mxu0 0.0
        %774 = vmatpush2.msra.mxu0 0.0
        %775 = vmatprep.subr.mxu0 0.0
        %776 = vmatpush2.msra.mxu0 0.0
        %777 = vmatprep.subr.mxu0 0.0
        %778 = vmatpush2.msra.mxu0 0.0
        %779 = vmatprep.mubr.f32.mxu0 0.0
        %v780 = vand.u32 %v256, 4294901760
        %781 = vmatmul.mubr.f32.gmra.mxu0 %v780
        %v782 = vpop.f32.mrf.mxu0
        %v783 = vadd.f32 %v672, %v782
        %v784 = vpop.f32.mrf.mxu0
        %v785 = vadd.f32 %v674, %v784
        %786 = vmatprep.mubr.f32.mxu0 0.0
        %v787 = vand.u32 %v259, 4294901760
        %788 = vmatmul.mubr.f32.gmra.mxu0 %v787
        %v789 = vpop.f32.mrf.mxu0
        %v790 = vadd.f32 %v681, %v789
        %v791 = vpop.f32.mrf.mxu0
        %v792 = vadd.f32 %v683, %v791
        %793 = vmatprep.mubr.f32.mxu0 0.0
        %v794 = vand.u32 %v262, 4294901760
        %795 = vmatmul.mubr.f32.gmra.mxu0 %v794
        %v796 = vpop.f32.mrf.mxu0
        %v797 = vadd.f32 %v690, %v796
        %v798 = vpop.f32.mrf.mxu0
        %v799 = vadd.f32 %v692, %v798
        %800 = vmatprep.mubr.f32.mxu0 0.0
        %v801 = vand.u32 %v265, 4294901760
        %802 = vmatmul.mubr.f32.gmra.mxu0 %v801
        %v803 = vpop.f32.mrf.mxu0
        %v804 = vadd.f32 %v699, %v803
        %v805 = vpop.f32.mrf.mxu0
        %v806 = vadd.f32 %v701, %v805
        %807 = vdwg.mxu0
        %808 = vmatprep.subr.mxu0 0.0
        %809 = vmatpush1.msra.mxu0 0.0
        %810 = vmatprep.subr.mxu0 0.0
        %811 = vmatpush1.msra.mxu0 0.0
        %812 = vmatprep.subr.mxu0 0.0
        %813 = vmatpush1.msra.mxu0 0.0
        %814 = vmatprep.subr.mxu0 0.0
        %815 = vmatpush1.msra.mxu0 0.0
        %816 = vmatprep.subr.mxu0 0.0
        %817 = vmatpush1.msra.mxu0 0.0
        %818 = vmatprep.subr.mxu0 0.0
        %819 = vmatpush1.msra.mxu0 0.0
        %820 = vmatprep.subr.mxu0 0.0
        %821 = vmatpush1.msra.mxu0 0.0
        %822 = vmatprep.subr.mxu0 0.0
        %823 = vmatpush1.msra.mxu0 0.0
        %824 = vmatprep.subr.mxu0 0.0
        %825 = vmatpush1.msra.mxu0 0.0
        %826 = vmatprep.subr.mxu0 0.0
        %827 = vmatpush1.msra.mxu0 0.0
        %828 = vmatprep.subr.mxu0 0.0
        %829 = vmatpush1.msra.mxu0 0.0
        %830 = vmatprep.subr.mxu0 0.0
        %831 = vmatpush1.msra.mxu0 0.0
        %832 = vmatprep.subr.mxu0 0.0
        %833 = vmatpush1.msra.mxu0 0.0
        %834 = vmatprep.subr.mxu0 0.0
        %835 = vmatpush1.msra.mxu0 0.0
        %v836 = vand.u32 %v253, 4294901760
        %837 = vmatprep.subr.mxu0 %v836
        %v838 = vand.u32 %v252, 4294901760
        %839 = vmatpush1.msra.mxu0 %v838
        %v840 = vand.u32 %v251, 4294901760
        %841 = vmatprep.subr.mxu0 %v840
        %v842 = vand.u32 %v250, 4294901760
        %843 = vmatpush1.msra.mxu0 %v842
        %844 = vmatprep.subr.mxu0 0.0
        %845 = vmatpush2.msra.mxu0 0.0
        %846 = vmatprep.subr.mxu0 0.0
        %847 = vmatpush2.msra.mxu0 0.0
        %848 = vmatprep.subr.mxu0 0.0
        %849 = vmatpush2.msra.mxu0 0.0
        %850 = vmatprep.subr.mxu0 0.0
        %851 = vmatpush2.msra.mxu0 0.0
        %852 = vmatprep.subr.mxu0 0.0
        %853 = vmatpush2.msra.mxu0 0.0
        %854 = vmatprep.subr.mxu0 0.0
        %855 = vmatpush2.msra.mxu0 0.0
        %856 = vmatprep.subr.mxu0 0.0
        %857 = vmatpush2.msra.mxu0 0.0
        %858 = vmatprep.subr.mxu0 0.0
        %859 = vmatpush2.msra.mxu0 0.0
        %860 = vmatprep.subr.mxu0 0.0
        %861 = vmatpush2.msra.mxu0 0.0
        %862 = vmatprep.subr.mxu0 0.0
        %863 = vmatpush2.msra.mxu0 0.0
        %864 = vmatprep.subr.mxu0 0.0
        %865 = vmatpush2.msra.mxu0 0.0
        %866 = vmatprep.subr.mxu0 0.0
        %867 = vmatpush2.msra.mxu0 0.0
        %868 = vmatprep.subr.mxu0 0.0
        %869 = vmatpush2.msra.mxu0 0.0
        %870 = vmatprep.subr.mxu0 0.0
        %871 = vmatpush2.msra.mxu0 0.0
        %872 = vmatprep.subr.mxu0 0.0
        %873 = vmatpush2.msra.mxu0 0.0
        %874 = vmatprep.subr.mxu0 0.0
        %875 = vmatpush2.msra.mxu0 0.0
        %876 = vmatprep.mubr.f32.mxu0 0.0
        %v877 = vand.u32 %v256, 4294901760
        %878 = vmatmul.mubr.f32.gmra.mxu0 %v877
        %v879 = vpop.f32.mrf.mxu0
        %v880 = vadd.f32 %v783, %v879
        %v881 = vpop.f32.mrf.mxu0
        %v882 = vadd.f32 %v785, %v881
        %883 = vmatprep.mubr.f32.mxu0 0.0
        %v884 = vand.u32 %v259, 4294901760
        %885 = vmatmul.mubr.f32.gmra.mxu0 %v884
        %v886 = vpop.f32.mrf.mxu0
        %v887 = vadd.f32 %v790, %v886
        %v888 = vpop.f32.mrf.mxu0
        %v889 = vadd.f32 %v792, %v888
        %890 = vmatprep.mubr.f32.mxu0 0.0
        %v891 = vand.u32 %v262, 4294901760
        %892 = vmatmul.mubr.f32.gmra.mxu0 %v891
        %v893 = vpop.f32.mrf.mxu0
        %v894 = vadd.f32 %v797, %v893
        %v895 = vpop.f32.mrf.mxu0
        %v896 = vadd.f32 %v799, %v895
        %897 = vmatprep.mubr.f32.mxu0 0.0
        %v898 = vand.u32 %v265, 4294901760
        %899 = vmatmul.mubr.f32.gmra.mxu0 %v898
        %v900 = vpop.f32.mrf.mxu0
        %v901 = vadd.f32 %v804, %v900
        %v902 = vpop.f32.mrf.mxu0
        %v903 = vadd.f32 %v806, %v902
        %904 = vdwg.mxu0
        %905 = vst [vmem:[%s239] sm:$0xff] %v880
        %906 = vst [vmem:[%s239 + $0x8] sm:$0xff] %v882
        %907 = vst [vmem:[%s239 + $0x10] sm:$0xff] %v887
        %908 = vst [vmem:[%s239 + $0x18] sm:$0xff] %v889
        %909 = vst [vmem:[%s239 + $0x20] sm:$0xff] %v894
        %910 = vst [vmem:[%s239 + $0x28] sm:$0xff] %v896
        %911 = vst [vmem:[%s239 + $0x30] sm:$0xff] %v901
        %912 = vst [vmem:[%s239 + $0x38] sm:$0xff] %v903
      $region40: #{position_embedding_learned.1} parent=35 // pred_fallthru
        _
      %p913 = scmp.eq.s32.totalorder %s19, 1
      // Predicated region
      $region41: #{position_embedding_learned.1} parent=35 // pred_check
        %p914 = pneg %p913
      $region42: #{position_embedding_learned.1} parent=35 // pred_check_branch
        %916 = sbr.rel (%p914) target = $region44
      $region43: #{position_embedding_learned.1} parent=35 // pred_region
        %v917 = vld [vmem:[%s231] sm:$0xff]
        %v918 = vld [vmem:[%s231 + $0x8] sm:$0xff]
        %v919 = vld [vmem:[%s231 + $0x10] sm:$0xff]
        %v920 = vld [vmem:[%s231 + $0x18] sm:$0xff]
        %v921 = vld [vmem:[%s3] sm:$0xff]
        %v922 = vld [vmem:[%s3 + $0x8] sm:$0xff]
        %v923 = vld [vmem:[%s3 + $0x10] sm:$0xff]
        %v924 = vld [vmem:[%s3 + $0x18] sm:$0xff]
        %vm925 = vcmask 130048
        %v927 = vsel %vm925, %v917, 0
        %v930 = vsel %vm925, %v918, 0
        %v933 = vsel %vm925, %v919, 0
        %v936 = vsel %vm925, %v920, 0
        %938 = vmatprep.subr.mxu0 0.0
        %939 = vmatpush1.msra.mxu0 0.0
        %940 = vmatprep.subr.mxu0 0.0
        %941 = vmatpush1.msra.mxu0 0.0
        %942 = vmatprep.subr.mxu0 0.0
        %943 = vmatpush1.msra.mxu0 0.0
        %944 = vmatprep.subr.mxu0 0.0
        %945 = vmatpush1.msra.mxu0 0.0
        %946 = vmatprep.subr.mxu0 0.0
        %947 = vmatpush1.msra.mxu0 0.0
        %948 = vmatprep.subr.mxu0 0.0
        %949 = vmatpush1.msra.mxu0 0.0
        %950 = vmatprep.subr.mxu0 0.0
        %951 = vmatpush1.msra.mxu0 0.0
        %952 = vmatprep.subr.mxu0 0.0
        %953 = vmatpush1.msra.mxu0 0.0
        %954 = vmatprep.subr.mxu0 0.0
        %955 = vmatpush1.msra.mxu0 0.0
        %956 = vmatprep.subr.mxu0 0.0
        %957 = vmatpush1.msra.mxu0 0.0
        %958 = vmatprep.subr.mxu0 0.0
        %959 = vmatpush1.msra.mxu0 0.0
        %960 = vmatprep.subr.mxu0 0.0
        %961 = vmatpush1.msra.mxu0 0.0
        %962 = vmatprep.subr.mxu0 0.0
        %963 = vmatpush1.msra.mxu0 0.0
        %964 = vmatprep.subr.mxu0 0.0
        %965 = vmatpush1.msra.mxu0 0.0
        %v966 = vand.u32 %v924, 4294901760
        %967 = vmatprep.subr.mxu0 %v966
        %v968 = vand.u32 %v923, 4294901760
        %969 = vmatpush1.msra.mxu0 %v968
        %v970 = vand.u32 %v922, 4294901760
        %971 = vmatprep.subr.mxu0 %v970
        %v972 = vand.u32 %v921, 4294901760
        %973 = vmatpush1.msra.mxu0 %v972
        %974 = vmatprep.subr.mxu0 0.0
        %975 = vmatpush2.msra.mxu0 0.0
        %976 = vmatprep.subr.mxu0 0.0
        %977 = vmatpush2.msra.mxu0 0.0
        %978 = vmatprep.subr.mxu0 0.0
        %979 = vmatpush2.msra.mxu0 0.0
        %980 = vmatprep.subr.mxu0 0.0
        %981 = vmatpush2.msra.mxu0 0.0
        %982 = vmatprep.subr.mxu0 0.0
        %983 = vmatpush2.msra.mxu0 0.0
        %984 = vmatprep.subr.mxu0 0.0
        %985 = vmatpush2.msra.mxu0 0.0
        %986 = vmatprep.subr.mxu0 0.0
        %987 = vmatpush2.msra.mxu0 0.0
        %988 = vmatprep.subr.mxu0 0.0
        %989 = vmatpush2.msra.mxu0 0.0
        %990 = vmatprep.subr.mxu0 0.0
        %991 = vmatpush2.msra.mxu0 0.0
        %992 = vmatprep.subr.mxu0 0.0
        %993 = vmatpush2.msra.mxu0 0.0
        %994 = vmatprep.subr.mxu0 0.0
        %995 = vmatpush2.msra.mxu0 0.0
        %996 = vmatprep.subr.mxu0 0.0
        %997 = vmatpush2.msra.mxu0 0.0
        %998 = vmatprep.subr.mxu0 0.0
        %999 = vmatpush2.msra.mxu0 0.0
        %1000 = vmatprep.subr.mxu0 0.0
        %1001 = vmatpush2.msra.mxu0 0.0
        %1002 = vmatprep.subr.mxu0 0.0
        %1003 = vmatpush2.msra.mxu0 0.0
        %1004 = vmatprep.subr.mxu0 0.0
        %1005 = vmatpush2.msra.mxu0 0.0
        %1006 = vmatprep.mubr.f32.mxu0 0.0
        %v1007 = vand.u32 %v927, 4294901760
        %v1008 = vsub.f32 %v927, %v1007
        %v1009 = vand.u32 %v1008, 4294901760
        %v1010 = vsub.f32 %v1008, %v1009
        %v1011 = vand.u32 %v1010, 4294901760
        %1012 = vmatmul.mubr.f32.gmra.mxu0 %v1011
        %v1013 = vpop.f32.mrf.mxu0
        %v1014 = vadd.f32 0.0, %v1013
        %v1015 = vpop.f32.mrf.mxu0
        %v1016 = vadd.f32 0.0, %v1015
        %1017 = vmatprep.mubr.f32.mxu0 0.0
        %v1018 = vand.u32 %v930, 4294901760
        %v1019 = vsub.f32 %v930, %v1018
        %v1020 = vand.u32 %v1019, 4294901760
        %v1021 = vsub.f32 %v1019, %v1020
        %v1022 = vand.u32 %v1021, 4294901760
        %1023 = vmatmul.mubr.f32.gmra.mxu0 %v1022
        %v1024 = vpop.f32.mrf.mxu0
        %v1025 = vadd.f32 0.0, %v1024
        %v1026 = vpop.f32.mrf.mxu0
        %v1027 = vadd.f32 0.0, %v1026
        %1028 = vmatprep.mubr.f32.mxu0 0.0
        %v1029 = vand.u32 %v933, 4294901760
        %v1030 = vsub.f32 %v933, %v1029
        %v1031 = vand.u32 %v1030, 4294901760
        %v1032 = vsub.f32 %v1030, %v1031
        %v1033 = vand.u32 %v1032, 4294901760
        %1034 = vmatmul.mubr.f32.gmra.mxu0 %v1033
        %v1035 = vpop.f32.mrf.mxu0
        %v1036 = vadd.f32 0.0, %v1035
        %v1037 = vpop.f32.mrf.mxu0
        %v1038 = vadd.f32 0.0, %v1037
        %1039 = vmatprep.mubr.f32.mxu0 0.0
        %v1040 = vand.u32 %v936, 4294901760
        %v1041 = vsub.f32 %v936, %v1040
        %v1042 = vand.u32 %v1041, 4294901760
        %v1043 = vsub.f32 %v1041, %v1042
        %v1044 = vand.u32 %v1043, 4294901760
        %1045 = vmatmul.mubr.f32.gmra.mxu0 %v1044
        %v1046 = vpop.f32.mrf.mxu0
        %v1047 = vadd.f32 0.0, %v1046
        %v1048 = vpop.f32.mrf.mxu0
        %v1049 = vadd.f32 0.0, %v1048
        %1050 = vdwg.mxu0
        %1051 = vmatprep.subr.mxu0 0.0
        %1052 = vmatpush1.msra.mxu0 0.0
        %1053 = vmatprep.subr.mxu0 0.0
        %1054 = vmatpush1.msra.mxu0 0.0
        %1055 = vmatprep.subr.mxu0 0.0
        %1056 = vmatpush1.msra.mxu0 0.0
        %1057 = vmatprep.subr.mxu0 0.0
        %1058 = vmatpush1.msra.mxu0 0.0
        %1059 = vmatprep.subr.mxu0 0.0
        %1060 = vmatpush1.msra.mxu0 0.0
        %1061 = vmatprep.subr.mxu0 0.0
        %1062 = vmatpush1.msra.mxu0 0.0
        %1063 = vmatprep.subr.mxu0 0.0
        %1064 = vmatpush1.msra.mxu0 0.0
        %1065 = vmatprep.subr.mxu0 0.0
        %1066 = vmatpush1.msra.mxu0 0.0
        %1067 = vmatprep.subr.mxu0 0.0
        %1068 = vmatpush1.msra.mxu0 0.0
        %1069 = vmatprep.subr.mxu0 0.0
        %1070 = vmatpush1.msra.mxu0 0.0
        %1071 = vmatprep.subr.mxu0 0.0
        %1072 = vmatpush1.msra.mxu0 0.0
        %1073 = vmatprep.subr.mxu0 0.0
        %1074 = vmatpush1.msra.mxu0 0.0
        %1075 = vmatprep.subr.mxu0 0.0
        %1076 = vmatpush1.msra.mxu0 0.0
        %1077 = vmatprep.subr.mxu0 0.0
        %1078 = vmatpush1.msra.mxu0 0.0
        %v1079 = vand.u32 %v924, 4294901760
        %v1080 = vsub.f32 %v924, %v1079
        %v1081 = vand.u32 %v1080, 4294901760
        %v1082 = vsub.f32 %v1080, %v1081
        %v1083 = vand.u32 %v1082, 4294901760
        %1084 = vmatprep.subr.mxu0 %v1083
        %v1085 = vand.u32 %v923, 4294901760
        %v1086 = vsub.f32 %v923, %v1085
        %v1087 = vand.u32 %v1086, 4294901760
        %v1088 = vsub.f32 %v1086, %v1087
        %v1089 = vand.u32 %v1088, 4294901760
        %1090 = vmatpush1.msra.mxu0 %v1089
        %v1091 = vand.u32 %v922, 4294901760
        %v1092 = vsub.f32 %v922, %v1091
        %v1093 = vand.u32 %v1092, 4294901760
        %v1094 = vsub.f32 %v1092, %v1093
        %v1095 = vand.u32 %v1094, 4294901760
        %1096 = vmatprep.subr.mxu0 %v1095
        %v1097 = vand.u32 %v921, 4294901760
        %v1098 = vsub.f32 %v921, %v1097
        %v1099 = vand.u32 %v1098, 4294901760
        %v1100 = vsub.f32 %v1098, %v1099
        %v1101 = vand.u32 %v1100, 4294901760
        %1102 = vmatpush1.msra.mxu0 %v1101
        %1103 = vmatprep.subr.mxu0 0.0
        %1104 = vmatpush2.msra.mxu0 0.0
        %1105 = vmatprep.subr.mxu0 0.0
        %1106 = vmatpush2.msra.mxu0 0.0
        %1107 = vmatprep.subr.mxu0 0.0
        %1108 = vmatpush2.msra.mxu0 0.0
        %1109 = vmatprep.subr.mxu0 0.0
        %1110 = vmatpush2.msra.mxu0 0.0
        %1111 = vmatprep.subr.mxu0 0.0
        %1112 = vmatpush2.msra.mxu0 0.0
        %1113 = vmatprep.subr.mxu0 0.0
        %1114 = vmatpush2.msra.mxu0 0.0
        %1115 = vmatprep.subr.mxu0 0.0
        %1116 = vmatpush2.msra.mxu0 0.0
        %1117 = vmatprep.subr.mxu0 0.0
        %1118 = vmatpush2.msra.mxu0 0.0
        %1119 = vmatprep.subr.mxu0 0.0
        %1120 = vmatpush2.msra.mxu0 0.0
        %1121 = vmatprep.subr.mxu0 0.0
        %1122 = vmatpush2.msra.mxu0 0.0
        %1123 = vmatprep.subr.mxu0 0.0
        %1124 = vmatpush2.msra.mxu0 0.0
        %1125 = vmatprep.subr.mxu0 0.0
        %1126 = vmatpush2.msra.mxu0 0.0
        %1127 = vmatprep.subr.mxu0 0.0
        %1128 = vmatpush2.msra.mxu0 0.0
        %1129 = vmatprep.subr.mxu0 0.0
        %1130 = vmatpush2.msra.mxu0 0.0
        %1131 = vmatprep.subr.mxu0 0.0
        %1132 = vmatpush2.msra.mxu0 0.0
        %1133 = vmatprep.subr.mxu0 0.0
        %1134 = vmatpush2.msra.mxu0 0.0
        %1135 = vmatprep.mubr.f32.mxu0 0.0
        %v1136 = vand.u32 %v927, 4294901760
        %1137 = vmatmul.mubr.f32.gmra.mxu0 %v1136
        %v1138 = vpop.f32.mrf.mxu0
        %v1139 = vadd.f32 %v1014, %v1138
        %v1140 = vpop.f32.mrf.mxu0
        %v1141 = vadd.f32 %v1016, %v1140
        %1142 = vmatprep.mubr.f32.mxu0 0.0
        %v1143 = vand.u32 %v930, 4294901760
        %1144 = vmatmul.mubr.f32.gmra.mxu0 %v1143
        %v1145 = vpop.f32.mrf.mxu0
        %v1146 = vadd.f32 %v1025, %v1145
        %v1147 = vpop.f32.mrf.mxu0
        %v1148 = vadd.f32 %v1027, %v1147
        %1149 = vmatprep.mubr.f32.mxu0 0.0
        %v1150 = vand.u32 %v933, 4294901760
        %1151 = vmatmul.mubr.f32.gmra.mxu0 %v1150
        %v1152 = vpop.f32.mrf.mxu0
        %v1153 = vadd.f32 %v1036, %v1152
        %v1154 = vpop.f32.mrf.mxu0
        %v1155 = vadd.f32 %v1038, %v1154
        %1156 = vmatprep.mubr.f32.mxu0 0.0
        %v1157 = vand.u32 %v936, 4294901760
        %1158 = vmatmul.mubr.f32.gmra.mxu0 %v1157
        %v1159 = vpop.f32.mrf.mxu0
        %v1160 = vadd.f32 %v1047, %v1159
        %v1161 = vpop.f32.mrf.mxu0
        %v1162 = vadd.f32 %v1049, %v1161
        %1163 = vdwg.mxu0
        %1164 = vmatprep.subr.mxu0 0.0
        %1165 = vmatpush1.msra.mxu0 0.0
        %1166 = vmatprep.subr.mxu0 0.0
        %1167 = vmatpush1.msra.mxu0 0.0
        %1168 = vmatprep.subr.mxu0 0.0
        %1169 = vmatpush1.msra.mxu0 0.0
        %1170 = vmatprep.subr.mxu0 0.0
        %1171 = vmatpush1.msra.mxu0 0.0
        %1172 = vmatprep.subr.mxu0 0.0
        %1173 = vmatpush1.msra.mxu0 0.0
        %1174 = vmatprep.subr.mxu0 0.0
        %1175 = vmatpush1.msra.mxu0 0.0
        %1176 = vmatprep.subr.mxu0 0.0
        %1177 = vmatpush1.msra.mxu0 0.0
        %1178 = vmatprep.subr.mxu0 0.0
        %1179 = vmatpush1.msra.mxu0 0.0
        %1180 = vmatprep.subr.mxu0 0.0
        %1181 = vmatpush1.msra.mxu0 0.0
        %1182 = vmatprep.subr.mxu0 0.0
        %1183 = vmatpush1.msra.mxu0 0.0
        %1184 = vmatprep.subr.mxu0 0.0
        %1185 = vmatpush1.msra.mxu0 0.0
        %1186 = vmatprep.subr.mxu0 0.0
        %1187 = vmatpush1.msra.mxu0 0.0
        %1188 = vmatprep.subr.mxu0 0.0
        %1189 = vmatpush1.msra.mxu0 0.0
        %1190 = vmatprep.subr.mxu0 0.0
        %1191 = vmatpush1.msra.mxu0 0.0
        %v1192 = vand.u32 %v924, 4294901760
        %v1193 = vsub.f32 %v924, %v1192
        %1194 = vmatprep.subr.mxu0 %v1193
        %v1195 = vand.u32 %v923, 4294901760
        %v1196 = vsub.f32 %v923, %v1195
        %1197 = vmatpush1.msra.mxu0 %v1196
        %v1198 = vand.u32 %v922, 4294901760
        %v1199 = vsub.f32 %v922, %v1198
        %1200 = vmatprep.subr.mxu0 %v1199
        %v1201 = vand.u32 %v921, 4294901760
        %v1202 = vsub.f32 %v921, %v1201
        %1203 = vmatpush1.msra.mxu0 %v1202
        %1204 = vmatprep.subr.mxu0 0.0
        %1205 = vmatpush2.msra.mxu0 0.0
        %1206 = vmatprep.subr.mxu0 0.0
        %1207 = vmatpush2.msra.mxu0 0.0
        %1208 = vmatprep.subr.mxu0 0.0
        %1209 = vmatpush2.msra.mxu0 0.0
        %1210 = vmatprep.subr.mxu0 0.0
        %1211 = vmatpush2.msra.mxu0 0.0
        %1212 = vmatprep.subr.mxu0 0.0
        %1213 = vmatpush2.msra.mxu0 0.0
        %1214 = vmatprep.subr.mxu0 0.0
        %1215 = vmatpush2.msra.mxu0 0.0
        %1216 = vmatprep.subr.mxu0 0.0
        %1217 = vmatpush2.msra.mxu0 0.0
        %1218 = vmatprep.subr.mxu0 0.0
        %1219 = vmatpush2.msra.mxu0 0.0
        %1220 = vmatprep.subr.mxu0 0.0
        %1221 = vmatpush2.msra.mxu0 0.0
        %1222 = vmatprep.subr.mxu0 0.0
        %1223 = vmatpush2.msra.mxu0 0.0
        %1224 = vmatprep.subr.mxu0 0.0
        %1225 = vmatpush2.msra.mxu0 0.0
        %1226 = vmatprep.subr.mxu0 0.0
        %1227 = vmatpush2.msra.mxu0 0.0
        %1228 = vmatprep.subr.mxu0 0.0
        %1229 = vmatpush2.msra.mxu0 0.0
        %1230 = vmatprep.subr.mxu0 0.0
        %1231 = vmatpush2.msra.mxu0 0.0
        %1232 = vmatprep.subr.mxu0 0.0
        %1233 = vmatpush2.msra.mxu0 0.0
        %1234 = vmatprep.subr.mxu0 0.0
        %1235 = vmatpush2.msra.mxu0 0.0
        %1236 = vmatprep.mubr.f32.mxu0 0.0
        %v1237 = vand.u32 %v927, 4294901760
        %v1238 = vsub.f32 %v927, %v1237
        %1239 = vmatmul.mubr.f32.gmra.mxu0 %v1238
        %v1240 = vpop.f32.mrf.mxu0
        %v1241 = vadd.f32 %v1139, %v1240
        %v1242 = vpop.f32.mrf.mxu0
        %v1243 = vadd.f32 %v1141, %v1242
        %1244 = vmatprep.mubr.f32.mxu0 0.0
        %v1245 = vand.u32 %v930, 4294901760
        %v1246 = vsub.f32 %v930, %v1245
        %1247 = vmatmul.mubr.f32.gmra.mxu0 %v1246
        %v1248 = vpop.f32.mrf.mxu0
        %v1249 = vadd.f32 %v1146, %v1248
        %v1250 = vpop.f32.mrf.mxu0
        %v1251 = vadd.f32 %v1148, %v1250
        %1252 = vmatprep.mubr.f32.mxu0 0.0
        %v1253 = vand.u32 %v933, 4294901760
        %v1254 = vsub.f32 %v933, %v1253
        %1255 = vmatmul.mubr.f32.gmra.mxu0 %v1254
        %v1256 = vpop.f32.mrf.mxu0
        %v1257 = vadd.f32 %v1153, %v1256
        %v1258 = vpop.f32.mrf.mxu0
        %v1259 = vadd.f32 %v1155, %v1258
        %1260 = vmatprep.mubr.f32.mxu0 0.0
        %v1261 = vand.u32 %v936, 4294901760
        %v1262 = vsub.f32 %v936, %v1261
        %1263 = vmatmul.mubr.f32.gmra.mxu0 %v1262
        %v1264 = vpop.f32.mrf.mxu0
        %v1265 = vadd.f32 %v1160, %v1264
        %v1266 = vpop.f32.mrf.mxu0
        %v1267 = vadd.f32 %v1162, %v1266
        %1268 = vdwg.mxu0
        %1269 = vmatprep.subr.mxu0 0.0
        %1270 = vmatpush1.msra.mxu0 0.0
        %1271 = vmatprep.subr.mxu0 0.0
        %1272 = vmatpush1.msra.mxu0 0.0
        %1273 = vmatprep.subr.mxu0 0.0
        %1274 = vmatpush1.msra.mxu0 0.0
        %1275 = vmatprep.subr.mxu0 0.0
        %1276 = vmatpush1.msra.mxu0 0.0
        %1277 = vmatprep.subr.mxu0 0.0
        %1278 = vmatpush1.msra.mxu0 0.0
        %1279 = vmatprep.subr.mxu0 0.0
        %1280 = vmatpush1.msra.mxu0 0.0
        %1281 = vmatprep.subr.mxu0 0.0
        %1282 = vmatpush1.msra.mxu0 0.0
        %1283 = vmatprep.subr.mxu0 0.0
        %1284 = vmatpush1.msra.mxu0 0.0
        %1285 = vmatprep.subr.mxu0 0.0
        %1286 = vmatpush1.msra.mxu0 0.0
        %1287 = vmatprep.subr.mxu0 0.0
        %1288 = vmatpush1.msra.mxu0 0.0
        %1289 = vmatprep.subr.mxu0 0.0
        %1290 = vmatpush1.msra.mxu0 0.0
        %1291 = vmatprep.subr.mxu0 0.0
        %1292 = vmatpush1.msra.mxu0 0.0
        %1293 = vmatprep.subr.mxu0 0.0
        %1294 = vmatpush1.msra.mxu0 0.0
        %1295 = vmatprep.subr.mxu0 0.0
        %1296 = vmatpush1.msra.mxu0 0.0
        %v1297 = vand.u32 %v924, 4294901760
        %1298 = vmatprep.subr.mxu0 %v1297
        %v1299 = vand.u32 %v923, 4294901760
        %1300 = vmatpush1.msra.mxu0 %v1299
        %v1301 = vand.u32 %v922, 4294901760
        %1302 = vmatprep.subr.mxu0 %v1301
        %v1303 = vand.u32 %v921, 4294901760
        %1304 = vmatpush1.msra.mxu0 %v1303
        %1305 = vmatprep.subr.mxu0 0.0
        %1306 = vmatpush2.msra.mxu0 0.0
        %1307 = vmatprep.subr.mxu0 0.0
        %1308 = vmatpush2.msra.mxu0 0.0
        %1309 = vmatprep.subr.mxu0 0.0
        %1310 = vmatpush2.msra.mxu0 0.0
        %1311 = vmatprep.subr.mxu0 0.0
        %1312 = vmatpush2.msra.mxu0 0.0
        %1313 = vmatprep.subr.mxu0 0.0
        %1314 = vmatpush2.msra.mxu0 0.0
        %1315 = vmatprep.subr.mxu0 0.0
        %1316 = vmatpush2.msra.mxu0 0.0
        %1317 = vmatprep.subr.mxu0 0.0
        %1318 = vmatpush2.msra.mxu0 0.0
        %1319 = vmatprep.subr.mxu0 0.0
        %1320 = vmatpush2.msra.mxu0 0.0
        %1321 = vmatprep.subr.mxu0 0.0
        %1322 = vmatpush2.msra.mxu0 0.0
        %1323 = vmatprep.subr.mxu0 0.0
        %1324 = vmatpush2.msra.mxu0 0.0
        %1325 = vmatprep.subr.mxu0 0.0
        %1326 = vmatpush2.msra.mxu0 0.0
        %1327 = vmatprep.subr.mxu0 0.0
        %1328 = vmatpush2.msra.mxu0 0.0
        %1329 = vmatprep.subr.mxu0 0.0
        %1330 = vmatpush2.msra.mxu0 0.0
        %1331 = vmatprep.subr.mxu0 0.0
        %1332 = vmatpush2.msra.mxu0 0.0
        %1333 = vmatprep.subr.mxu0 0.0
        %1334 = vmatpush2.msra.mxu0 0.0
        %1335 = vmatprep.subr.mxu0 0.0
        %1336 = vmatpush2.msra.mxu0 0.0
        %1337 = vmatprep.mubr.f32.mxu0 0.0
        %v1338 = vand.u32 %v927, 4294901760
        %v1339 = vsub.f32 %v927, %v1338
        %v1340 = vand.u32 %v1339, 4294901760
        %1341 = vmatmul.mubr.f32.gmra.mxu0 %v1340
        %v1342 = vpop.f32.mrf.mxu0
        %v1343 = vadd.f32 %v1241, %v1342
        %v1344 = vpop.f32.mrf.mxu0
        %v1345 = vadd.f32 %v1243, %v1344
        %1346 = vmatprep.mubr.f32.mxu0 0.0
        %v1347 = vand.u32 %v930, 4294901760
        %v1348 = vsub.f32 %v930, %v1347
        %v1349 = vand.u32 %v1348, 4294901760
        %1350 = vmatmul.mubr.f32.gmra.mxu0 %v1349
        %v1351 = vpop.f32.mrf.mxu0
        %v1352 = vadd.f32 %v1249, %v1351
        %v1353 = vpop.f32.mrf.mxu0
        %v1354 = vadd.f32 %v1251, %v1353
        %1355 = vmatprep.mubr.f32.mxu0 0.0
        %v1356 = vand.u32 %v933, 4294901760
        %v1357 = vsub.f32 %v933, %v1356
        %v1358 = vand.u32 %v1357, 4294901760
        %1359 = vmatmul.mubr.f32.gmra.mxu0 %v1358
        %v1360 = vpop.f32.mrf.mxu0
        %v1361 = vadd.f32 %v1257, %v1360
        %v1362 = vpop.f32.mrf.mxu0
        %v1363 = vadd.f32 %v1259, %v1362
        %1364 = vmatprep.mubr.f32.mxu0 0.0
        %v1365 = vand.u32 %v936, 4294901760
        %v1366 = vsub.f32 %v936, %v1365
        %v1367 = vand.u32 %v1366, 4294901760
        %1368 = vmatmul.mubr.f32.gmra.mxu0 %v1367
        %v1369 = vpop.f32.mrf.mxu0
        %v1370 = vadd.f32 %v1265, %v1369
        %v1371 = vpop.f32.mrf.mxu0
        %v1372 = vadd.f32 %v1267, %v1371
        %1373 = vdwg.mxu0
        %1374 = vmatprep.subr.mxu0 0.0
        %1375 = vmatpush1.msra.mxu0 0.0
        %1376 = vmatprep.subr.mxu0 0.0
        %1377 = vmatpush1.msra.mxu0 0.0
        %1378 = vmatprep.subr.mxu0 0.0
        %1379 = vmatpush1.msra.mxu0 0.0
        %1380 = vmatprep.subr.mxu0 0.0
        %1381 = vmatpush1.msra.mxu0 0.0
        %1382 = vmatprep.subr.mxu0 0.0
        %1383 = vmatpush1.msra.mxu0 0.0
        %1384 = vmatprep.subr.mxu0 0.0
        %1385 = vmatpush1.msra.mxu0 0.0
        %1386 = vmatprep.subr.mxu0 0.0
        %1387 = vmatpush1.msra.mxu0 0.0
        %1388 = vmatprep.subr.mxu0 0.0
        %1389 = vmatpush1.msra.mxu0 0.0
        %1390 = vmatprep.subr.mxu0 0.0
        %1391 = vmatpush1.msra.mxu0 0.0
        %1392 = vmatprep.subr.mxu0 0.0
        %1393 = vmatpush1.msra.mxu0 0.0
        %1394 = vmatprep.subr.mxu0 0.0
        %1395 = vmatpush1.msra.mxu0 0.0
        %1396 = vmatprep.subr.mxu0 0.0
        %1397 = vmatpush1.msra.mxu0 0.0
        %1398 = vmatprep.subr.mxu0 0.0
        %1399 = vmatpush1.msra.mxu0 0.0
        %1400 = vmatprep.subr.mxu0 0.0
        %1401 = vmatpush1.msra.mxu0 0.0
        %v1402 = vand.u32 %v924, 4294901760
        %v1403 = vsub.f32 %v924, %v1402
        %v1404 = vand.u32 %v1403, 4294901760
        %1405 = vmatprep.subr.mxu0 %v1404
        %v1406 = vand.u32 %v923, 4294901760
        %v1407 = vsub.f32 %v923, %v1406
        %v1408 = vand.u32 %v1407, 4294901760
        %1409 = vmatpush1.msra.mxu0 %v1408
        %v1410 = vand.u32 %v922, 4294901760
        %v1411 = vsub.f32 %v922, %v1410
        %v1412 = vand.u32 %v1411, 4294901760
        %1413 = vmatprep.subr.mxu0 %v1412
        %v1414 = vand.u32 %v921, 4294901760
        %v1415 = vsub.f32 %v921, %v1414
        %v1416 = vand.u32 %v1415, 4294901760
        %1417 = vmatpush1.msra.mxu0 %v1416
        %1418 = vmatprep.subr.mxu0 0.0
        %1419 = vmatpush2.msra.mxu0 0.0
        %1420 = vmatprep.subr.mxu0 0.0
        %1421 = vmatpush2.msra.mxu0 0.0
        %1422 = vmatprep.subr.mxu0 0.0
        %1423 = vmatpush2.msra.mxu0 0.0
        %1424 = vmatprep.subr.mxu0 0.0
        %1425 = vmatpush2.msra.mxu0 0.0
        %1426 = vmatprep.subr.mxu0 0.0
        %1427 = vmatpush2.msra.mxu0 0.0
        %1428 = vmatprep.subr.mxu0 0.0
        %1429 = vmatpush2.msra.mxu0 0.0
        %1430 = vmatprep.subr.mxu0 0.0
        %1431 = vmatpush2.msra.mxu0 0.0
        %1432 = vmatprep.subr.mxu0 0.0
        %1433 = vmatpush2.msra.mxu0 0.0
        %1434 = vmatprep.subr.mxu0 0.0
        %1435 = vmatpush2.msra.mxu0 0.0
        %1436 = vmatprep.subr.mxu0 0.0
        %1437 = vmatpush2.msra.mxu0 0.0
        %1438 = vmatprep.subr.mxu0 0.0
        %1439 = vmatpush2.msra.mxu0 0.0
        %1440 = vmatprep.subr.mxu0 0.0
        %1441 = vmatpush2.msra.mxu0 0.0
        %1442 = vmatprep.subr.mxu0 0.0
        %1443 = vmatpush2.msra.mxu0 0.0
        %1444 = vmatprep.subr.mxu0 0.0
        %1445 = vmatpush2.msra.mxu0 0.0
        %1446 = vmatprep.subr.mxu0 0.0
        %1447 = vmatpush2.msra.mxu0 0.0
        %1448 = vmatprep.subr.mxu0 0.0
        %1449 = vmatpush2.msra.mxu0 0.0
        %1450 = vmatprep.mubr.f32.mxu0 0.0
        %v1451 = vand.u32 %v927, 4294901760
        %1452 = vmatmul.mubr.f32.gmra.mxu0 %v1451
        %v1453 = vpop.f32.mrf.mxu0
        %v1454 = vadd.f32 %v1343, %v1453
        %v1455 = vpop.f32.mrf.mxu0
        %v1456 = vadd.f32 %v1345, %v1455
        %1457 = vmatprep.mubr.f32.mxu0 0.0
        %v1458 = vand.u32 %v930, 4294901760
        %1459 = vmatmul.mubr.f32.gmra.mxu0 %v1458
        %v1460 = vpop.f32.mrf.mxu0
        %v1461 = vadd.f32 %v1352, %v1460
        %v1462 = vpop.f32.mrf.mxu0
        %v1463 = vadd.f32 %v1354, %v1462
        %1464 = vmatprep.mubr.f32.mxu0 0.0
        %v1465 = vand.u32 %v933, 4294901760
        %1466 = vmatmul.mubr.f32.gmra.mxu0 %v1465
        %v1467 = vpop.f32.mrf.mxu0
        %v1468 = vadd.f32 %v1361, %v1467
        %v1469 = vpop.f32.mrf.mxu0
        %v1470 = vadd.f32 %v1363, %v1469
        %1471 = vmatprep.mubr.f32.mxu0 0.0
        %v1472 = vand.u32 %v936, 4294901760
        %1473 = vmatmul.mubr.f32.gmra.mxu0 %v1472
        %v1474 = vpop.f32.mrf.mxu0
        %v1475 = vadd.f32 %v1370, %v1474
        %v1476 = vpop.f32.mrf.mxu0
        %v1477 = vadd.f32 %v1372, %v1476
        %1478 = vdwg.mxu0
        %1479 = vmatprep.subr.mxu0 0.0
        %1480 = vmatpush1.msra.mxu0 0.0
        %1481 = vmatprep.subr.mxu0 0.0
        %1482 = vmatpush1.msra.mxu0 0.0
        %1483 = vmatprep.subr.mxu0 0.0
        %1484 = vmatpush1.msra.mxu0 0.0
        %1485 = vmatprep.subr.mxu0 0.0
        %1486 = vmatpush1.msra.mxu0 0.0
        %1487 = vmatprep.subr.mxu0 0.0
        %1488 = vmatpush1.msra.mxu0 0.0
        %1489 = vmatprep.subr.mxu0 0.0
        %1490 = vmatpush1.msra.mxu0 0.0
        %1491 = vmatprep.subr.mxu0 0.0
        %1492 = vmatpush1.msra.mxu0 0.0
        %1493 = vmatprep.subr.mxu0 0.0
        %1494 = vmatpush1.msra.mxu0 0.0
        %1495 = vmatprep.subr.mxu0 0.0
        %1496 = vmatpush1.msra.mxu0 0.0
        %1497 = vmatprep.subr.mxu0 0.0
        %1498 = vmatpush1.msra.mxu0 0.0
        %1499 = vmatprep.subr.mxu0 0.0
        %1500 = vmatpush1.msra.mxu0 0.0
        %1501 = vmatprep.subr.mxu0 0.0
        %1502 = vmatpush1.msra.mxu0 0.0
        %1503 = vmatprep.subr.mxu0 0.0
        %1504 = vmatpush1.msra.mxu0 0.0
        %1505 = vmatprep.subr.mxu0 0.0
        %1506 = vmatpush1.msra.mxu0 0.0
        %v1507 = vand.u32 %v924, 4294901760
        %1508 = vmatprep.subr.mxu0 %v1507
        %v1509 = vand.u32 %v923, 4294901760
        %1510 = vmatpush1.msra.mxu0 %v1509
        %v1511 = vand.u32 %v922, 4294901760
        %1512 = vmatprep.subr.mxu0 %v1511
        %v1513 = vand.u32 %v921, 4294901760
        %1514 = vmatpush1.msra.mxu0 %v1513
        %1515 = vmatprep.subr.mxu0 0.0
        %1516 = vmatpush2.msra.mxu0 0.0
        %1517 = vmatprep.subr.mxu0 0.0
        %1518 = vmatpush2.msra.mxu0 0.0
        %1519 = vmatprep.subr.mxu0 0.0
        %1520 = vmatpush2.msra.mxu0 0.0
        %1521 = vmatprep.subr.mxu0 0.0
        %1522 = vmatpush2.msra.mxu0 0.0
        %1523 = vmatprep.subr.mxu0 0.0
        %1524 = vmatpush2.msra.mxu0 0.0
        %1525 = vmatprep.subr.mxu0 0.0
        %1526 = vmatpush2.msra.mxu0 0.0
        %1527 = vmatprep.subr.mxu0 0.0
        %1528 = vmatpush2.msra.mxu0 0.0
        %1529 = vmatprep.subr.mxu0 0.0
        %1530 = vmatpush2.msra.mxu0 0.0
        %1531 = vmatprep.subr.mxu0 0.0
        %1532 = vmatpush2.msra.mxu0 0.0
        %1533 = vmatprep.subr.mxu0 0.0
        %1534 = vmatpush2.msra.mxu0 0.0
        %1535 = vmatprep.subr.mxu0 0.0
        %1536 = vmatpush2.msra.mxu0 0.0
        %1537 = vmatprep.subr.mxu0 0.0
        %1538 = vmatpush2.msra.mxu0 0.0
        %1539 = vmatprep.subr.mxu0 0.0
        %1540 = vmatpush2.msra.mxu0 0.0
        %1541 = vmatprep.subr.mxu0 0.0
        %1542 = vmatpush2.msra.mxu0 0.0
        %1543 = vmatprep.subr.mxu0 0.0
        %1544 = vmatpush2.msra.mxu0 0.0
        %1545 = vmatprep.subr.mxu0 0.0
        %1546 = vmatpush2.msra.mxu0 0.0
        %1547 = vmatprep.mubr.f32.mxu0 0.0
        %v1548 = vand.u32 %v927, 4294901760
        %1549 = vmatmul.mubr.f32.gmra.mxu0 %v1548
        %v1550 = vpop.f32.mrf.mxu0
        %v1551 = vadd.f32 %v1454, %v1550
        %v1552 = vpop.f32.mrf.mxu0
        %v1553 = vadd.f32 %v1456, %v1552
        %1554 = vmatprep.mubr.f32.mxu0 0.0
        %v1555 = vand.u32 %v930, 4294901760
        %1556 = vmatmul.mubr.f32.gmra.mxu0 %v1555
        %v1557 = vpop.f32.mrf.mxu0
        %v1558 = vadd.f32 %v1461, %v1557
        %v1559 = vpop.f32.mrf.mxu0
        %v1560 = vadd.f32 %v1463, %v1559
        %1561 = vmatprep.mubr.f32.mxu0 0.0
        %v1562 = vand.u32 %v933, 4294901760
        %1563 = vmatmul.mubr.f32.gmra.mxu0 %v1562
        %v1564 = vpop.f32.mrf.mxu0
        %v1565 = vadd.f32 %v1468, %v1564
        %v1566 = vpop.f32.mrf.mxu0
        %v1567 = vadd.f32 %v1470, %v1566
        %1568 = vmatprep.mubr.f32.mxu0 0.0
        %v1569 = vand.u32 %v936, 4294901760
        %1570 = vmatmul.mubr.f32.gmra.mxu0 %v1569
        %v1571 = vpop.f32.mrf.mxu0
        %v1572 = vadd.f32 %v1475, %v1571
        %v1573 = vpop.f32.mrf.mxu0
        %v1574 = vadd.f32 %v1477, %v1573
        %1575 = vdwg.mxu0
        %1576 = vst [vmem:[%s239] sm:$0xff] %v1551
        %1577 = vst [vmem:[%s239 + $0x8] sm:$0xff] %v1553
        %1578 = vst [vmem:[%s239 + $0x10] sm:$0xff] %v1558
        %1579 = vst [vmem:[%s239 + $0x18] sm:$0xff] %v1560
        %1580 = vst [vmem:[%s239 + $0x20] sm:$0xff] %v1565
        %1581 = vst [vmem:[%s239 + $0x28] sm:$0xff] %v1567
        %1582 = vst [vmem:[%s239 + $0x30] sm:$0xff] %v1572
        %1583 = vst [vmem:[%s239 + $0x38] sm:$0xff] %v1574
      $region44: #{position_embedding_learned.1} parent=35 // pred_fallthru
        _
      %s1584 = sadd.s32 %s19, %s20
      %s1585 = smul.u32 4, %s1584
      %p1586 = scmp.lt.s32.totalorder %s1585, 7
      %s1587 = scalar_select %p1586, %s1585, 7
      %s1588 = smul.addr %s1587, 2
      %s1589 = smul.addr %s1588, 8
      %s1590 = scalar_lea.vmem %s4, %s1589
      // Predicated region
      $region45: #{position_embedding_learned.1} parent=35 // pred_check
        %p1591 = pneg %p141
      $region46: #{position_embedding_learned.1} parent=35 // pred_check_branch
        %1593 = sbr.rel (%p1591) target = $region48
      $region47: #{position_embedding_learned.1} parent=35 // pred_region
        %s1594 = sadd.s32 %s19, %s20
        %s1595 = smul.u32 4, %s1594
      $region48: #{position_embedding_learned.1} parent=35 // pred_fallthru
        _
    $region36: #{position_embedding_learned.1} parent=5 // pred_fallthru
      _
    %p1596 = scmp.le.s32.totalorder 2, %s10
    // Predicated region
    $region49: #{position_embedding_learned.1} parent=5 // pred_check
      %p1597 = pneg %p1596
    $region50: #{position_embedding_learned.1} parent=5 // pred_check_branch
      %1599 = sbr.rel (%p1597) target = $region52
    $region51: #{position_embedding_learned.1} parent=5 // pred_region
      %s1600 = ssub.s32 %s10, 2
      // Predicated region
      $region53: #{position_embedding_learned.1} parent=51 // pred_check
        %p1601 = pneg %p147
      $region54: #{position_embedding_learned.1} parent=51 // pred_check_branch
        %1603 = sbr.rel (%p1601) target = $region56
      $region55: #{position_embedding_learned.1} parent=51 // pred_region
        %s1604 = sadd.s32 %s21, %s22
        %s1605 = smul.u32 4, %s1604
        %p1606 = scmp.lt.s32.totalorder %s1605, 7
        %s1607 = scalar_select %p1606, %s1605, 7
        %s1608 = smul.addr %s1607, 2
        %s1609 = smul.addr %s1608, 8
        %s1610 = scalar_lea.vmem %s4, %s1609
      $region56: #{position_embedding_learned.1} parent=51 // pred_fallthru
        _
    $region52: #{position_embedding_learned.1} parent=5 // pred_fallthru
      _
  $region6: #{position_embedding_learned.1} parent=0 // loop_footer
    %s14 = sadd.s32 1, %s10
  $region7: #{position_embedding_learned.1} parent=0 // loop_footer_branch
    %9 = sbr.rel target = $region3
  $region8: #{position_embedding_learned.1} parent=0 // loop_exit
    _

</llo_original>
